<compile_context>
chip_gen: v6e
topology: v6e:2x2x1
jax: 0.10.0
libtpu: 0.0.40
codegen_flags: <defaults>
</compile_context>

<pallas_src>
import functools

import jax
import jax.numpy as jnp
import numpy as np
from jax.experimental import pallas as pl
from jax.experimental.pallas import tpu as pltpu


def _round_up(x, m):
    return (x + m - 1) // m * m


def _cdiv(a, b):
    return -(-a // b)


def _sigmoid(x):
    # single-EUP logistic: sigmoid(x) == 0.5 * (1 + tanh(x/2))  (exact)
    return 0.5 * jnp.tanh(0.5 * x) + 0.5


def _gru_kernel(maxlen_ref, len_ref, x_ref, wih_ref, whh_ref, bi_ref, bhn_ref,
                out_ref, hid_ref, gi_scr, h_scr):
    """One (batch-chunk, time-chunk) grid step of the GRU recurrence.

    Shapes (Hp = lane-padded hidden size, 3Hp = fused r|z|n gate lanes):
      maxlen_ref : (n_b,)  int32 SMEM   max valid length per batch chunk
      len_ref    : (Bc, 1) int32        valid length per sequence
      x_ref      : (Tc, Bc, I)          time-major input chunk (pipelined)
      wih_ref    : (I,  3Hp)            fused input weights   [W_ir|W_iz|W_in]^T
      whh_ref    : (Hp, 3Hp)            fused hidden weights  [W_hr|W_hz|W_hn]^T
      bi_ref     : (1,  3Hp) f32        fused bias [b_ir+b_hr | b_iz+b_hz | b_in]
      bhn_ref    : (1,  Hp)  f32        b_hn (must stay inside r * (...))
      out_ref    : (Tc, Bc, Hp)         per-step outputs (zeros for padded steps)
      hid_ref    : (Bc, Hp)             hidden state at the last valid step
      gi_scr     : (Tc, Bc, 3Hp) f32    per-chunk input projections (VMEM scratch)
      h_scr      : (Bc, Hp)      f32    running hidden state (persists across chunks)
    """
    Tc, bc, _ = x_ref.shape
    Hp = hid_ref.shape[-1]
    b_blk = pl.program_id(0)
    t_blk = pl.program_id(1)
    t0 = t_blk * Tc

    @pl.when(t_blk == 0)
    def _init():
        h_scr[...] = jnp.zeros_like(h_scr)

    # Skip time chunks that are entirely past every sequence in this batch chunk.
    chunk_live = t0 < maxlen_ref[b_blk]

    @pl.when(chunk_live)
    def _compute():
        # ---- Stage 1: one fused MXU matmul for the whole chunk ---------------
        x_flat = x_ref[...].reshape(Tc * bc, x_ref.shape[-1])
        gi = jnp.dot(x_flat, wih_ref[...], preferred_element_type=jnp.float32)
        gi_scr[...] = (gi + bi_ref[...]).reshape(Tc, bc, 3 * Hp)

        whh = whh_ref[...]                         # (Hp, 3Hp), bf16 or f32
        bhn = bhn_ref[...]                         # (1, Hp) f32
        rel_len = len_ref[...] - t0                # (bc, 1) int32, hoisted

        # Two independent recurrence chains (half batches) when bc allows, so the
        # scheduler can overlap one chain's MXU dot with the other's EUP/VPU work.
        if bc >= 16 and bc % 16 == 0:
            chains = [(0, bc // 2), (bc // 2, bc)]
        else:
            chains = [(0, bc)]

        hs = [h_scr[r0:r1, :] for (r0, r1) in chains]
        rls = [rel_len[r0:r1, :] for (r0, r1) in chains]
        bhns = [jnp.broadcast_to(bhn, (r1 - r0, Hp)) for (r0, r1) in chains]

        # ---- Stage 2: serial recurrence, fully unrolled (static indices) -----
        for i in range(Tc):
            g_all = gi_scr[i]                                  # (bc, 3Hp), dense vld
            ghs = [jnp.dot(hs[c].astype(whh.dtype), whh,
                           preferred_element_type=jnp.float32)
                   for c in range(len(chains))]
            new_hs = []
            for c, (r0, r1) in enumerate(chains):
                g, gh, h = g_all[r0:r1, :], ghs[c], hs[c]
                r = _sigmoid(g[:, :Hp] + gh[:, :Hp])
                z = _sigmoid(g[:, Hp:2 * Hp] + gh[:, Hp:2 * Hp])
                n = jnp.tanh(g[:, 2 * Hp:] + r * (gh[:, 2 * Hp:] + bhns[c]))
                h_new = n + z * (h - n)                        # == (1-z)*n + z*h
                valid = rls[c] > i                             # (rows, 1) bool
                out_ref[i, r0:r1, :] = jnp.where(valid, h_new, 0.0).astype(out_ref.dtype)
                new_hs.append(jnp.where(valid, h_new, h))
            hs = new_hs

        for c, (r0, r1) in enumerate(chains):
            h_scr[r0:r1, :] = hs[c]

    @pl.when(jnp.logical_not(chunk_live))
    def _dead():
        # Fully padded chunk: keep h untouched, but zero the output block so the
        # padded T region never carries stale VMEM contents.
        out_ref[...] = jnp.zeros_like(out_ref)

    @pl.when(t_blk == pl.num_programs(1) - 1)
    def _finalize():
        hid_ref[...] = h_scr[...].astype(hid_ref.dtype)


def init_gru_params(key, input_size, hidden_size):
    """PyTorch nn.GRU init: uniform(-1/sqrt(H), 1/sqrt(H)); gate order (r, z, n)."""
    H, I = hidden_size, input_size
    k = 1.0 / np.sqrt(H)
    keys = jax.random.split(key, 4)
    w_ih = jax.random.uniform(keys[0], (3 * H, I), jnp.float32, -k, k)
    w_hh = jax.random.uniform(keys[1], (3 * H, H), jnp.float32, -k, k)
    b_ih = jax.random.uniform(keys[2], (3 * H,), jnp.float32, -k, k)
    b_hh = jax.random.uniform(keys[3], (3 * H,), jnp.float32, -k, k)

    wir, wiz, win = [w_ih[g * H:(g + 1) * H].T for g in range(3)]   # (I, H)
    whr, whz, whn = [w_hh[g * H:(g + 1) * H].T for g in range(3)]   # (H, H)
    bir, biz, bin_ = [b_ih[g * H:(g + 1) * H].reshape(1, H) for g in range(3)]
    bhr, bhz, bhn = [b_hh[g * H:(g + 1) * H].reshape(1, H) for g in range(3)]
    return (wir, wiz, win, whr, whz, whn, bir, biz, bin_, bhr, bhz, bhn)


def fuse_gru_params(params, hidden_size, hidden_pad, compute_dtype=jnp.bfloat16):
    """Fuse per-gate GRU params into lane-padded, MXU-friendly matrices.

    Zero-padding the extra H lanes keeps padded hidden lanes exactly 0 throughout
    the recurrence (gi=gh=bias=0 -> n=0, h_new=0); 0 also survives the bf16 cast.
    Weights go to `compute_dtype` (MXU operands); biases stay f32 (added in f32).
    """
    (wir, wiz, win, whr, whz, whn, bir, biz, bin_, bhr, bhz, bhn) = params
    H, Hp = hidden_size, hidden_pad

    def pad_h(a):                                  # zero-pad the (lane) H axis
        return jnp.pad(a, ((0, 0), (0, Hp - H)))

    wih = jnp.concatenate([pad_h(wir), pad_h(wiz), pad_h(win)], axis=1)        # (I, 3Hp)
    whh = jnp.concatenate([pad_h(whr), pad_h(whz), pad_h(whn)], axis=1)        # (H, 3Hp)
    whh = jnp.pad(whh, ((0, Hp - H), (0, 0)))                                  # (Hp, 3Hp)
    bi = jnp.concatenate([pad_h(bir + bhr), pad_h(biz + bhz), pad_h(bin_)],
                         axis=1).astype(jnp.float32)                           # (1, 3Hp)
    bhn_p = pad_h(bhn).astype(jnp.float32)                                     # (1, Hp)
    return wih.astype(compute_dtype), whh.astype(compute_dtype), bi, bhn_p


def _pick_batch_tiling(B, max_bc=128):
    """Pick (bc, B_pad, n_b): bc as large as reasonable (the recurrence is
    latency-bound), n_b even when > 1 so a v7x megacore gets both TensorCores."""
    b8 = _round_up(B, 8)
    if b8 <= 16:
        return b8, b8, 1
    n_b = max(2, _cdiv(b8, max_bc))
    if n_b % 2:
        n_b += 1
    bc = _round_up(_cdiv(b8, n_b), 8)
    return bc, bc * n_b, n_b


def _vmem_bytes(Tc, bc, I, Hp, x_bytes, w_bytes):
    th = 3 * Hp
    weights = (I * th + Hp * th) * w_bytes + (th + Hp) * 4      # resident, single copy
    x_buf = 2 * Tc * bc * I * x_bytes                           # double-buffered
    out_buf = 2 * Tc * bc * Hp * 4                              # double-buffered
    hid_buf = 2 * bc * Hp * 4
    gi = Tc * bc * th * 4
    h = bc * Hp * 4
    misc = 2 * bc * 4 + 4096
    return weights + x_buf + out_buf + hid_buf + gi + h + misc


def _pick_time_tiling(T, bc, I, Hp, x_bytes, w_bytes):
    """Pick Tc (full-unroll factor) under an explicit VMEM budget; shrink Tc before bc.
    Budget kept well under v5e's raised scope / v7x's 64 MiB physical."""
    budget = 28 * 1024 * 1024
    Tc = min(16, _round_up(max(T, 1), 8))
    while Tc > 8 and _vmem_bytes(Tc, bc, I, Hp, x_bytes, w_bytes) > budget:
        Tc -= 8
    est = _vmem_bytes(Tc, bc, I, Hp, x_bytes, w_bytes)
    vmem_limit = int(min(48 * 1024 * 1024,
                         max(16 * 1024 * 1024, est + est // 2 + (2 << 20))))
    return Tc, vmem_limit


@functools.partial(jax.jit, static_argnames=("hidden_size",))
def _encoder_pallas(x_bti, lengths_i32, wih, whh, bi, bhn, hidden_size):
    """x_bti: (B, T, I) float32, lengths_i32: (B,) int32; fused/padded params."""
    B, T, I = x_bti.shape
    H = hidden_size
    Hp = whh.shape[0]                       # lane-padded hidden size (multiple of 128)
    three_hp = wih.shape[1]
    cdt = wih.dtype                          # MXU compute dtype (bf16 or f32)
    cbytes = jnp.dtype(cdt).itemsize

    # ---- tile sizing (explicit VMEM budget; see helpers) --------------------
    bc, B_pad, n_b = _pick_batch_tiling(B)
    Tc, vmem_limit = _pick_time_tiling(T, bc, I, Hp, cbytes, cbytes)
    T_pad = _round_up(T, Tc)
    n_t = T_pad // Tc

    # Time-major + zero-pad batch/time (x is the small tensor: I << Hp lanes).
    x_tbi = jnp.transpose(x_bti, (1, 0, 2)).astype(cdt)
    x_tbi = jnp.pad(x_tbi, ((0, T_pad - T), (0, B_pad - B), (0, 0)))
    lengths_col = jnp.pad(lengths_i32.astype(jnp.int32),
                          (0, B_pad - B)).reshape(B_pad, 1)
    # per-batch-chunk max length -> SMEM, used to skip fully-masked time chunks
    maxlen = jnp.max(lengths_col.reshape(n_b, bc), axis=1)      # (n_b,) int32

    resident = pl.BlockSpec(memory_space=pltpu.MemorySpace.VMEM)   # weights stay in VMEM
    smem_all = pl.BlockSpec(memory_space=pltpu.MemorySpace.SMEM)   # scalar schedule data

    out_tbh, hid_bh = pl.pallas_call(
        _gru_kernel,
        out_shape=(
            jax.ShapeDtypeStruct((T_pad, B_pad, Hp), jnp.float32),
            jax.ShapeDtypeStruct((B_pad, Hp), jnp.float32),
        ),
        grid=(n_b, n_t),
        in_specs=[
            smem_all,                                              # maxlen per batch chunk
            pl.BlockSpec((bc, 1), lambda b, t: (b, 0)),            # lengths
            pl.BlockSpec((Tc, bc, I), lambda b, t: (t, b, 0)),     # x chunk (pipelined)
            resident, resident, resident, resident,                # wih, whh, bi, bhn
        ],
        out_specs=(
            pl.BlockSpec((Tc, bc, Hp), lambda b, t: (t, b, 0)),    # output chunk (pipelined)
            pl.BlockSpec((bc, Hp), lambda b, t: (b, 0)),           # final hidden (resident over t)
        ),
        scratch_shapes=[
            pltpu.VMEM((Tc, bc, three_hp), jnp.float32),           # gi for the chunk
            pltpu.VMEM((bc, Hp), jnp.float32),                     # running hidden state
        ],
        compiler_params=pltpu.CompilerParams(
            dimension_semantics=("parallel", "arbitrary"),
            vmem_limit_bytes=vmem_limit),
    )(maxlen, lengths_col, x_tbi, wih, whh, bi, bhn)

    output_bth = jnp.transpose(out_tbh[:T, :B, :H], (1, 0, 2))     # back to batch-first
    hidden = hid_bh[:B, :H].reshape(1, B, H)                       # (num_layers=1, B, H)
    return output_bth, hidden


def encoder_forward(x, lengths, params, hidden_size, compute_dtype=jnp.bfloat16):
    """Mirrors Encoder.forward: returns (output, hidden).

    output: (B, max(lengths), H)  -- pad_packed_sequence trims to longest sequence
    hidden: (1, B, H)
    """
    hidden_pad = _round_up(hidden_size, 128)
    wih, whh, bi, bhn = fuse_gru_params(params, hidden_size, hidden_pad, compute_dtype)
    lengths_np = np.asarray(lengths)
    t_out = int(lengths_np.max())
    lengths_i32 = jnp.asarray(lengths_np, jnp.int32)
    output_full, hidden = _encoder_pallas(x, lengths_i32, wih, whh, bi, bhn,
                                          hidden_size=hidden_size)
    return output_full[:, :t_out, :], hidden


def _reference_gru(x, lengths, params, hidden_size):
    """Pure-JAX f32 reference for numerical verification (unfused params)."""
    (wir, wiz, win, whr, whz, whn, bir, biz, bin_, bhr, bhz, bhn) = params
    B, T, _ = x.shape
    H = hidden_size
    h = jnp.zeros((B, H), jnp.float32)
    lengths = jnp.asarray(np.asarray(lengths), jnp.int32).reshape(B, 1)
    outs = []
    for t in range(T):
        x_t = x[:, t, :]
        r = jax.nn.sigmoid(x_t @ wir + bir + h @ whr + bhr)
        z = jax.nn.sigmoid(x_t @ wiz + biz + h @ whz + bhz)
        n = jnp.tanh(x_t @ win + bin_ + r * (h @ whn + bhn))
        h_new = (1.0 - z) * n + z * h
        mask = (lengths > t).astype(jnp.float32)
        h = mask * h_new + (1.0 - mask) * h
        outs.append(mask * h_new)
    t_out = int(np.max(np.asarray(lengths)))
    return jnp.stack(outs, axis=1)[:, :t_out, :], h.reshape(1, B, H)


if __name__ == "__main__":
    INPUT_SIZE = 3
    HIDDEN_SIZE = 8
    B, T = 4, 8
    lengths = [8, 5, 7, 3]   # per-sequence valid lengths (CPU values, as in PyTorch)

    key = jax.random.PRNGKey(0)
    k_x, k_p = jax.random.split(key)
    x = jax.random.normal(k_x, (B, T, INPUT_SIZE), jnp.float32)
    params = init_gru_params(k_p, INPUT_SIZE, HIDDEN_SIZE)

    ref_out, ref_hid = _reference_gru(x, lengths, params, HIDDEN_SIZE)

    # 1) f32 path: exact check of the kernel logic (tight tolerance).
    out32, hid32 = encoder_forward(x, lengths, params, HIDDEN_SIZE,
                                   compute_dtype=jnp.float32)
    jax.block_until_ready((out32, hid32))
    np.testing.assert_allclose(np.asarray(out32), np.asarray(ref_out),
                               rtol=1e-5, atol=1e-5)
    np.testing.assert_allclose(np.asarray(hid32), np.asarray(ref_hid),
                               rtol=1e-5, atol=1e-5)

    # 2) bf16 MXU path (default, ~2x MXU/DMA): f32 gate math, loosened tolerance.
    output, hidden = encoder_forward(x, lengths, params, HIDDEN_SIZE,
                                     compute_dtype=jnp.bfloat16)
    output = jax.block_until_ready(output)
    hidden = jax.block_until_ready(hidden)
    np.testing.assert_allclose(np.asarray(output), np.asarray(ref_out),
                               rtol=3e-2, atol=3e-2)
    np.testing.assert_allclose(np.asarray(hidden), np.asarray(ref_hid),
                               rtol=3e-2, atol=3e-2)

    assert output.shape == (B, max(lengths), HIDDEN_SIZE)
    assert hidden.shape == (1, B, HIDDEN_SIZE)
    print("KERNEL_OK")
</pallas_src>

<mosaic_0001>
module attributes {stable_mosaic.version = 11 : i64} {
  func.func @_gru_kernel(%arg0: i32, %arg1: i32, %arg2: memref<1xi32, #tpu.memory_space<smem>>, %arg3: memref<8x1xi32, #tpu.memory_space<vmem>>, %arg4: memref<8x8x3xf32, #tpu.memory_space<vmem>>, %arg5: memref<3x384xf32, #tpu.memory_space<vmem>>, %arg6: memref<128x384xf32, #tpu.memory_space<vmem>>, %arg7: memref<1x384xf32, #tpu.memory_space<vmem>>, %arg8: memref<1x128xf32, #tpu.memory_space<vmem>>, %arg9: memref<8x8x128xf32, #tpu.memory_space<vmem>>, %arg10: memref<8x128xf32, #tpu.memory_space<vmem>>, %arg11: memref<8x8x384xf32, #tpu.memory_space<vmem>>, %arg12: memref<8x128xf32, #tpu.memory_space<vmem>>) attributes {dimension_semantics = [#tpu.dimension_semantics<parallel>, #tpu.dimension_semantics<arbitrary>], iteration_bounds = array<i64: 1, 1>, scalar_prefetch = 0 : i64, scratch_operands = 2 : i64, tpu.core_type = #tpu.core_type<tc>, window_params = [{transform_indices = @transform_0, window_bounds = array<i64: 1>}, {transform_indices = @transform_1, window_bounds = array<i64: 8, 1>}, {transform_indices = @transform_2, window_bounds = array<i64: 8, 8, 3>}, {pipeline_mode = #tpu.pipeline_mode<synchronous>, transform_indices = @transform_3, window_bounds = array<i64: 3, 384>}, {pipeline_mode = #tpu.pipeline_mode<synchronous>, transform_indices = @transform_4, window_bounds = array<i64: 128, 384>}, {pipeline_mode = #tpu.pipeline_mode<synchronous>, transform_indices = @transform_5, window_bounds = array<i64: 1, 384>}, {pipeline_mode = #tpu.pipeline_mode<synchronous>, transform_indices = @transform_6, window_bounds = array<i64: 1, 128>}, {transform_indices = @transform_7, window_bounds = array<i64: 8, 8, 128>}, {transform_indices = @transform_8, window_bounds = array<i64: 8, 128>}]} {
    %c8_i32 = arith.constant 8 : i32
    %0 = arith.muli %arg1, %c8_i32 : i32
    %c0_i32 = arith.constant 0 : i32
    %1 = arith.cmpi eq, %arg1, %c0_i32 : i32
    %2 = arith.extui %1 : i1 to i32
    %c0_i32_0 = arith.constant 0 : i32
    %3 = arith.cmpi ne, %2, %c0_i32_0 : i32
    scf.if %3 {
      %cst = arith.constant 0.000000e+00 : f32
      %15 = vector.broadcast %cst : f32 to vector<8x128xf32>
      %c0 = arith.constant 0 : index
      %c0_5 = arith.constant 0 : index
      %16 = vector.load %arg12[%c0, %c0_5] : memref<8x128xf32, #tpu.memory_space<vmem>>, vector<8x128xf32>
      tpu.vector_store %arg12[%c0, %c0_5], %15 {strides = array<i32>} : memref<8x128xf32, #tpu.memory_space<vmem>>, vector<8x128xf32>,
    } else {
    }
    %4 = arith.index_cast %arg0 : i32 to index
    %5 = memref.load %arg2[%4] : memref<1xi32, #tpu.memory_space<smem>>
    %6 = arith.cmpi slt, %0, %5 : i32
    %7 = arith.extui %6 : i1 to i32
    %c0_i32_1 = arith.constant 0 : i32
    %8 = arith.cmpi ne, %7, %c0_i32_1 : i32
    scf.if %8 {
      %c0 = arith.constant 0 : index
      %c0_5 = arith.constant 0 : index
      %c0_6 = arith.constant 0 : index
      %15 = vector.load %arg4[%c0, %c0_5, %c0_6] : memref<8x8x3xf32, #tpu.memory_space<vmem>>, vector<8x8x3xf32>
      %16 = vector.shape_cast %15 : vector<8x8x3xf32> to vector<64x3xf32>
      %c0_7 = arith.constant 0 : index
      %c0_8 = arith.constant 0 : index
      %17 = vector.load %arg5[%c0_7, %c0_8] : memref<3x384xf32, #tpu.memory_space<vmem>>, vector<3x384xf32>
      %cst = arith.constant dense<0.000000e+00> : vector<64x384xf32>
      %18 = tpu.matmul %16, %17, %cst {dimension_numbers = #tpu.dot_dimension_numbers<[1], [0], [0], [1], [0, 0, 1, 1], [], []>} : vector<64x3xf32>, vector<3x384xf32>, vector<64x384xf32> -> vector<64x384xf32>
      %c0_9 = arith.constant 0 : index
      %c0_10 = arith.constant 0 : index
      %19 = vector.load %arg7[%c0_9, %c0_10] : memref<1x384xf32, #tpu.memory_space<vmem>>, vector<1x384xf32>
      %20 = vector.broadcast %19 : vector<1x384xf32> to vector<64x384xf32>
      %21 = arith.addf %18, %20 : vector<64x384xf32>
      %22 = vector.shape_cast %21 : vector<64x384xf32> to vector<8x8x384xf32>
      %c0_11 = arith.constant 0 : index
      %c0_12 = arith.constant 0 : index
      %c0_13 = arith.constant 0 : index
      %23 = vector.load %arg11[%c0_11, %c0_12, %c0_13] : memref<8x8x384xf32, #tpu.memory_space<vmem>>, vector<8x8x384xf32>
      tpu.vector_store %arg11[%c0_11, %c0_12, %c0_13], %22 {strides = array<i32>} : memref<8x8x384xf32, #tpu.memory_space<vmem>>, vector<8x8x384xf32>,
      %c0_14 = arith.constant 0 : index
      %c0_15 = arith.constant 0 : index
      %24 = vector.load %arg6[%c0_14, %c0_15] : memref<128x384xf32, #tpu.memory_space<vmem>>, vector<128x384xf32>
      %c0_16 = arith.constant 0 : index
      %c0_17 = arith.constant 0 : index
      %25 = vector.load %arg8[%c0_16, %c0_17] : memref<1x128xf32, #tpu.memory_space<vmem>>, vector<1x128xf32>
      %c0_18 = arith.constant 0 : index
      %c0_19 = arith.constant 0 : index
      %26 = vector.load %arg3[%c0_18, %c0_19] : memref<8x1xi32, #tpu.memory_space<vmem>>, vector<8x1xi32>
      %27 = vector.broadcast %0 : i32 to vector<8x1xi32>
      %28 = arith.subi %26, %27 : vector<8x1xi32>
      %c0_20 = arith.constant 0 : index
      %c0_21 = arith.constant 0 : index
      %29 = vector.load %arg12[%c0_20, %c0_21] : memref<8x128xf32, #tpu.memory_space<vmem>>, vector<8x128xf32>
      %30 = vector.shape_cast %25 : vector<1x128xf32> to vector<1x128xf32>
      %31 = vector.broadcast %30 : vector<1x128xf32> to vector<8x128xf32>
      %c0_22 = arith.constant 0 : index
      %c0_23 = arith.constant 0 : index
      %c0_24 = arith.constant 0 : index
      %32 = vector.load %arg11[%c0_22, %c0_23, %c0_24] : memref<8x8x384xf32, #tpu.memory_space<vmem>>, vector<1x8x384xf32>
      %33 = vector.shape_cast %32 : vector<1x8x384xf32> to vector<8x384xf32>
      %cst_25 = arith.constant dense<0.000000e+00> : vector<8x384xf32>
      %34 = tpu.matmul %29, %24, %cst_25 {dimension_numbers = #tpu.dot_dimension_numbers<[1], [0], [0], [1], [0, 0, 1, 1], [], []>} : vector<8x128xf32>, vector<128x384xf32>, vector<8x384xf32> -> vector<8x384xf32>
      %35 = vector.extract_strided_slice %33 {offsets = [0, 0], sizes = [8, 128], strides = [1, 1]} : vector<8x384xf32> to vector<8x128xf32>
      %36 = vector.extract_strided_slice %34 {offsets = [0, 0], sizes = [8, 128], strides = [1, 1]} : vector<8x384xf32> to vector<8x128xf32>
      %37 = arith.addf %35, %36 : vector<8x128xf32>
      %cst_26 = arith.constant 5.000000e-01 : f32
      %38 = vector.broadcast %cst_26 : f32 to vector<8x128xf32>
      %39 = arith.mulf %38, %37 : vector<8x128xf32>
      %40 = math.tanh %39 : vector<8x128xf32>
      %cst_27 = arith.constant 5.000000e-01 : f32
      %41 = vector.broadcast %cst_27 : f32 to vector<8x128xf32>
      %42 = arith.mulf %41, %40 : vector<8x128xf32>
      %cst_28 = arith.constant 5.000000e-01 : f32
      %43 = vector.broadcast %cst_28 : f32 to vector<8x128xf32>
      %44 = arith.addf %42, %43 : vector<8x128xf32>
      %45 = vector.extract_strided_slice %33 {offsets = [0, 128], sizes = [8, 128], strides = [1, 1]} : vector<8x384xf32> to vector<8x128xf32>
      %46 = vector.extract_strided_slice %34 {offsets = [0, 128], sizes = [8, 128], strides = [1, 1]} : vector<8x384xf32> to vector<8x128xf32>
      %47 = arith.addf %45, %46 : vector<8x128xf32>
      %cst_29 = arith.constant 5.000000e-01 : f32
      %48 = vector.broadcast %cst_29 : f32 to vector<8x128xf32>
      %49 = arith.mulf %48, %47 : vector<8x128xf32>
      %50 = math.tanh %49 : vector<8x128xf32>
      %cst_30 = arith.constant 5.000000e-01 : f32
      %51 = vector.broadcast %cst_30 : f32 to vector<8x128xf32>
      %52 = arith.mulf %51, %50 : vector<8x128xf32>
      %cst_31 = arith.constant 5.000000e-01 : f32
      %53 = vector.broadcast %cst_31 : f32 to vector<8x128xf32>
      %54 = arith.addf %52, %53 : vector<8x128xf32>
      %55 = vector.extract_strided_slice %33 {offsets = [0, 256], sizes = [8, 128], strides = [1, 1]} : vector<8x384xf32> to vector<8x128xf32>
      %56 = vector.extract_strided_slice %34 {offsets = [0, 256], sizes = [8, 128], strides = [1, 1]} : vector<8x384xf32> to vector<8x128xf32>
      %57 = arith.addf %56, %31 : vector<8x128xf32>
      %58 = arith.mulf %44, %57 : vector<8x128xf32>
      %59 = arith.addf %55, %58 : vector<8x128xf32>
      %60 = math.tanh %59 : vector<8x128xf32>
      %61 = arith.subf %29, %60 : vector<8x128xf32>
      %62 = arith.mulf %54, %61 : vector<8x128xf32>
      %63 = arith.addf %60, %62 : vector<8x128xf32>
      %c0_i32_32 = arith.constant 0 : i32
      %64 = vector.broadcast %c0_i32_32 : i32 to vector<8x1xi32>
      %65 = arith.cmpi sgt, %28, %64 : vector<8x1xi32>
      %cst_33 = arith.constant 0.000000e+00 : f32
      %66 = vector.shape_cast %65 : vector<8x1xi1> to vector<8x1xi1>
      %67 = vector.broadcast %66 : vector<8x1xi1> to vector<8x128xi1>
      %68 = vector.broadcast %cst_33 : f32 to vector<8x128xf32>
      %69 = arith.select %67, %63, %68 : vector<8x128xi1>, vector<8x128xf32>
      %c0_34 = arith.constant 0 : index
      %c0_35 = arith.constant 0 : index
      %c0_36 = arith.constant 0 : index
      %70 = vector.load %arg9[%c0_34, %c0_35, %c0_36] : memref<8x8x128xf32, #tpu.memory_space<vmem>>, vector<1x8x128xf32>
      %71 = vector.shape_cast %70 : vector<1x8x128xf32> to vector<8x128xf32>
      %72 = vector.shape_cast %69 : vector<8x128xf32> to vector<1x8x128xf32>
      tpu.vector_store %arg9[%c0_34, %c0_35, %c0_36], %72 {strides = array<i32>} : memref<8x8x128xf32, #tpu.memory_space<vmem>>, vector<1x8x128xf32>,
      %73 = vector.shape_cast %65 : vector<8x1xi1> to vector<8x1xi1>
      %74 = vector.broadcast %73 : vector<8x1xi1> to vector<8x128xi1>
      %75 = arith.select %74, %63, %29 : vector<8x128xi1>, vector<8x128xf32>
      %c1 = arith.constant 1 : index
      %c0_37 = arith.constant 0 : index
      %c0_38 = arith.constant 0 : index
      %76 = vector.load %arg11[%c1, %c0_37, %c0_38] : memref<8x8x384xf32, #tpu.memory_space<vmem>>, vector<1x8x384xf32>
      %77 = vector.shape_cast %76 : vector<1x8x384xf32> to vector<8x384xf32>
      %cst_39 = arith.constant dense<0.000000e+00> : vector<8x384xf32>
      %78 = tpu.matmul %75, %24, %cst_39 {dimension_numbers = #tpu.dot_dimension_numbers<[1], [0], [0], [1], [0, 0, 1, 1], [], []>} : vector<8x128xf32>, vector<128x384xf32>, vector<8x384xf32> -> vector<8x384xf32>
      %79 = vector.extract_strided_slice %77 {offsets = [0, 0], sizes = [8, 128], strides = [1, 1]} : vector<8x384xf32> to vector<8x128xf32>
      %80 = vector.extract_strided_slice %78 {offsets = [0, 0], sizes = [8, 128], strides = [1, 1]} : vector<8x384xf32> to vector<8x128xf32>
      %81 = arith.addf %79, %80 : vector<8x128xf32>
      %cst_40 = arith.constant 5.000000e-01 : f32
      %82 = vector.broadcast %cst_40 : f32 to vector<8x128xf32>
      %83 = arith.mulf %82, %81 : vector<8x128xf32>
      %84 = math.tanh %83 : vector<8x128xf32>
      %cst_41 = arith.constant 5.000000e-01 : f32
      %85 = vector.broadcast %cst_41 : f32 to vector<8x128xf32>
      %86 = arith.mulf %85, %84 : vector<8x128xf32>
      %cst_42 = arith.constant 5.000000e-01 : f32
      %87 = vector.broadcast %cst_42 : f32 to vector<8x128xf32>
      %88 = arith.addf %86, %87 : vector<8x128xf32>
      %89 = vector.extract_strided_slice %77 {offsets = [0, 128], sizes = [8, 128], strides = [1, 1]} : vector<8x384xf32> to vector<8x128xf32>
      %90 = vector.extract_strided_slice %78 {offsets = [0, 128], sizes = [8, 128], strides = [1, 1]} : vector<8x384xf32> to vector<8x128xf32>
      %91 = arith.addf %89, %90 : vector<8x128xf32>
      %cst_43 = arith.constant 5.000000e-01 : f32
      %92 = vector.broadcast %cst_43 : f32 to vector<8x128xf32>
      %93 = arith.mulf %92, %91 : vector<8x128xf32>
      %94 = math.tanh %93 : vector<8x128xf32>
      %cst_44 = arith.constant 5.000000e-01 : f32
      %95 = vector.broadcast %cst_44 : f32 to vector<8x128xf32>
      %96 = arith.mulf %95, %94 : vector<8x128xf32>
      %cst_45 = arith.constant 5.000000e-01 : f32
      %97 = vector.broadcast %cst_45 : f32 to vector<8x128xf32>
      %98 = arith.addf %96, %97 : vector<8x128xf32>
      %99 = vector.extract_strided_slice %77 {offsets = [0, 256], sizes = [8, 128], strides = [1, 1]} : vector<8x384xf32> to vector<8x128xf32>
      %100 = vector.extract_strided_slice %78 {offsets = [0, 256], sizes = [8, 128], strides = [1, 1]} : vector<8x384xf32> to vector<8x128xf32>
      %101 = arith.addf %100, %31 : vector<8x128xf32>
      %102 = arith.mulf %88, %101 : vector<8x128xf32>
      %103 = arith.addf %99, %102 : vector<8x128xf32>
      %104 = math.tanh %103 : vector<8x128xf32>
      %105 = arith.subf %75, %104 : vector<8x128xf32>
      %106 = arith.mulf %98, %105 : vector<8x128xf32>
      %107 = arith.addf %104, %106 : vector<8x128xf32>
      %c1_i32 = arith.constant 1 : i32
      %108 = vector.broadcast %c1_i32 : i32 to vector<8x1xi32>
      %109 = arith.cmpi sgt, %28, %108 : vector<8x1xi32>
      %cst_46 = arith.constant 0.000000e+00 : f32
      %110 = vector.shape_cast %109 : vector<8x1xi1> to vector<8x1xi1>
      %111 = vector.broadcast %110 : vector<8x1xi1> to vector<8x128xi1>
      %112 = vector.broadcast %cst_46 : f32 to vector<8x128xf32>
      %113 = arith.select %111, %107, %112 : vector<8x128xi1>, vector<8x128xf32>
      %c1_47 = arith.constant 1 : index
      %c0_48 = arith.constant 0 : index
      %c0_49 = arith.constant 0 : index
      %114 = vector.load %arg9[%c1_47, %c0_48, %c0_49] : memref<8x8x128xf32, #tpu.memory_space<vmem>>, vector<1x8x128xf32>
      %115 = vector.shape_cast %114 : vector<1x8x128xf32> to vector<8x128xf32>
      %116 = vector.shape_cast %113 : vector<8x128xf32> to vector<1x8x128xf32>
      tpu.vector_store %arg9[%c1_47, %c0_48, %c0_49], %116 {strides = array<i32>} : memref<8x8x128xf32, #tpu.memory_space<vmem>>, vector<1x8x128xf32>,
      %117 = vector.shape_cast %109 : vector<8x1xi1> to vector<8x1xi1>
      %118 = vector.broadcast %117 : vector<8x1xi1> to vector<8x128xi1>
      %119 = arith.select %118, %107, %75 : vector<8x128xi1>, vector<8x128xf32>
      %c2 = arith.constant 2 : index
      %c0_50 = arith.constant 0 : index
      %c0_51 = arith.constant 0 : index
      %120 = vector.load %arg11[%c2, %c0_50, %c0_51] : memref<8x8x384xf32, #tpu.memory_space<vmem>>, vector<1x8x384xf32>
      %121 = vector.shape_cast %120 : vector<1x8x384xf32> to vector<8x384xf32>
      %cst_52 = arith.constant dense<0.000000e+00> : vector<8x384xf32>
      %122 = tpu.matmul %119, %24, %cst_52 {dimension_numbers = #tpu.dot_dimension_numbers<[1], [0], [0], [1], [0, 0, 1, 1], [], []>} : vector<8x128xf32>, vector<128x384xf32>, vector<8x384xf32> -> vector<8x384xf32>
      %123 = vector.extract_strided_slice %121 {offsets = [0, 0], sizes = [8, 128], strides = [1, 1]} : vector<8x384xf32> to vector<8x128xf32>
      %124 = vector.extract_strided_slice %122 {offsets = [0, 0], sizes = [8, 128], strides = [1, 1]} : vector<8x384xf32> to vector<8x128xf32>
      %125 = arith.addf %123, %124 : vector<8x128xf32>
      %cst_53 = arith.constant 5.000000e-01 : f32
      %126 = vector.broadcast %cst_53 : f32 to vector<8x128xf32>
      %127 = arith.mulf %126, %125 : vector<8x128xf32>
      %128 = math.tanh %127 : vector<8x128xf32>
      %cst_54 = arith.constant 5.000000e-01 : f32
      %129 = vector.broadcast %cst_54 : f32 to vector<8x128xf32>
      %130 = arith.mulf %129, %128 : vector<8x128xf32>
      %cst_55 = arith.constant 5.000000e-01 : f32
      %131 = vector.broadcast %cst_55 : f32 to vector<8x128xf32>
      %132 = arith.addf %130, %131 : vector<8x128xf32>
      %133 = vector.extract_strided_slice %121 {offsets = [0, 128], sizes = [8, 128], strides = [1, 1]} : vector<8x384xf32> to vector<8x128xf32>
      %134 = vector.extract_strided_slice %122 {offsets = [0, 128], sizes = [8, 128], strides = [1, 1]} : vector<8x384xf32> to vector<8x128xf32>
      %135 = arith.addf %133, %134 : vector<8x128xf32>
      %cst_56 = arith.constant 5.000000e-01 : f32
      %136 = vector.broadcast %cst_56 : f32 to vector<8x128xf32>
      %137 = arith.mulf %136, %135 : vector<8x128xf32>
      %138 = math.tanh %137 : vector<8x128xf32>
      %cst_57 = arith.constant 5.000000e-01 : f32
      %139 = vector.broadcast %cst_57 : f32 to vector<8x128xf32>
      %140 = arith.mulf %139, %138 : vector<8x128xf32>
      %cst_58 = arith.constant 5.000000e-01 : f32
      %141 = vector.broadcast %cst_58 : f32 to vector<8x128xf32>
      %142 = arith.addf %140, %141 : vector<8x128xf32>
      %143 = vector.extract_strided_slice %121 {offsets = [0, 256], sizes = [8, 128], strides = [1, 1]} : vector<8x384xf32> to vector<8x128xf32>
      %144 = vector.extract_strided_slice %122 {offsets = [0, 256], sizes = [8, 128], strides = [1, 1]} : vector<8x384xf32> to vector<8x128xf32>
      %145 = arith.addf %144, %31 : vector<8x128xf32>
      %146 = arith.mulf %132, %145 : vector<8x128xf32>
      %147 = arith.addf %143, %146 : vector<8x128xf32>
      %148 = math.tanh %147 : vector<8x128xf32>
      %149 = arith.subf %119, %148 : vector<8x128xf32>
      %150 = arith.mulf %142, %149 : vector<8x128xf32>
      %151 = arith.addf %148, %150 : vector<8x128xf32>
      %c2_i32 = arith.constant 2 : i32
      %152 = vector.broadcast %c2_i32 : i32 to vector<8x1xi32>
      %153 = arith.cmpi sgt, %28, %152 : vector<8x1xi32>
      %cst_59 = arith.constant 0.000000e+00 : f32
      %154 = vector.shape_cast %153 : vector<8x1xi1> to vector<8x1xi1>
      %155 = vector.broadcast %154 : vector<8x1xi1> to vector<8x128xi1>
      %156 = vector.broadcast %cst_59 : f32 to vector<8x128xf32>
      %157 = arith.select %155, %151, %156 : vector<8x128xi1>, vector<8x128xf32>
      %c2_60 = arith.constant 2 : index
      %c0_61 = arith.constant 0 : index
      %c0_62 = arith.constant 0 : index
      %158 = vector.load %arg9[%c2_60, %c0_61, %c0_62] : memref<8x8x128xf32, #tpu.memory_space<vmem>>, vector<1x8x128xf32>
      %159 = vector.shape_cast %158 : vector<1x8x128xf32> to vector<8x128xf32>
      %160 = vector.shape_cast %157 : vector<8x128xf32> to vector<1x8x128xf32>
      tpu.vector_store %arg9[%c2_60, %c0_61, %c0_62], %160 {strides = array<i32>} : memref<8x8x128xf32, #tpu.memory_space<vmem>>, vector<1x8x128xf32>,
      %161 = vector.shape_cast %153 : vector<8x1xi1> to vector<8x1xi1>
      %162 = vector.broadcast %161 : vector<8x1xi1> to vector<8x128xi1>
      %163 = arith.select %162, %151, %119 : vector<8x128xi1>, vector<8x128xf32>
      %c3 = arith.constant 3 : index
      %c0_63 = arith.constant 0 : index
      %c0_64 = arith.constant 0 : index
      %164 = vector.load %arg11[%c3, %c0_63, %c0_64] : memref<8x8x384xf32, #tpu.memory_space<vmem>>, vector<1x8x384xf32>
      %165 = vector.shape_cast %164 : vector<1x8x384xf32> to vector<8x384xf32>
      %cst_65 = arith.constant dense<0.000000e+00> : vector<8x384xf32>
      %166 = tpu.matmul %163, %24, %cst_65 {dimension_numbers = #tpu.dot_dimension_numbers<[1], [0], [0], [1], [0, 0, 1, 1], [], []>} : vector<8x128xf32>, vector<128x384xf32>, vector<8x384xf32> -> vector<8x384xf32>
      %167 = vector.extract_strided_slice %165 {offsets = [0, 0], sizes = [8, 128], strides = [1, 1]} : vector<8x384xf32> to vector<8x128xf32>
      %168 = vector.extract_strided_slice %166 {offsets = [0, 0], sizes = [8, 128], strides = [1, 1]} : vector<8x384xf32> to vector<8x128xf32>
      %169 = arith.addf %167, %168 : vector<8x128xf32>
      %cst_66 = arith.constant 5.000000e-01 : f32
      %170 = vector.broadcast %cst_66 : f32 to vector<8x128xf32>
      %171 = arith.mulf %170, %169 : vector<8x128xf32>
      %172 = math.tanh %171 : vector<8x128xf32>
      %cst_67 = arith.constant 5.000000e-01 : f32
      %173 = vector.broadcast %cst_67 : f32 to vector<8x128xf32>
      %174 = arith.mulf %173, %172 : vector<8x128xf32>
      %cst_68 = arith.constant 5.000000e-01 : f32
      %175 = vector.broadcast %cst_68 : f32 to vector<8x128xf32>
      %176 = arith.addf %174, %175 : vector<8x128xf32>
      %177 = vector.extract_strided_slice %165 {offsets = [0, 128], sizes = [8, 128], strides = [1, 1]} : vector<8x384xf32> to vector<8x128xf32>
      %178 = vector.extract_strided_slice %166 {offsets = [0, 128], sizes = [8, 128], strides = [1, 1]} : vector<8x384xf32> to vector<8x128xf32>
      %179 = arith.addf %177, %178 : vector<8x128xf32>
      %cst_69 = arith.constant 5.000000e-01 : f32
      %180 = vector.broadcast %cst_69 : f32 to vector<8x128xf32>
      %181 = arith.mulf %180, %179 : vector<8x128xf32>
      %182 = math.tanh %181 : vector<8x128xf32>
      %cst_70 = arith.constant 5.000000e-01 : f32
      %183 = vector.broadcast %cst_70 : f32 to vector<8x128xf32>
      %184 = arith.mulf %183, %182 : vector<8x128xf32>
      %cst_71 = arith.constant 5.000000e-01 : f32
      %185 = vector.broadcast %cst_71 : f32 to vector<8x128xf32>
      %186 = arith.addf %184, %185 : vector<8x128xf32>
      %187 = vector.extract_strided_slice %165 {offsets = [0, 256], sizes = [8, 128], strides = [1, 1]} : vector<8x384xf32> to vector<8x128xf32>
      %188 = vector.extract_strided_slice %166 {offsets = [0, 256], sizes = [8, 128], strides = [1, 1]} : vector<8x384xf32> to vector<8x128xf32>
      %189 = arith.addf %188, %31 : vector<8x128xf32>
      %190 = arith.mulf %176, %189 : vector<8x128xf32>
      %191 = arith.addf %187, %190 : vector<8x128xf32>
      %192 = math.tanh %191 : vector<8x128xf32>
      %193 = arith.subf %163, %192 : vector<8x128xf32>
      %194 = arith.mulf %186, %193 : vector<8x128xf32>
      %195 = arith.addf %192, %194 : vector<8x128xf32>
      %c3_i32 = arith.constant 3 : i32
      %196 = vector.broadcast %c3_i32 : i32 to vector<8x1xi32>
      %197 = arith.cmpi sgt, %28, %196 : vector<8x1xi32>
      %cst_72 = arith.constant 0.000000e+00 : f32
      %198 = vector.shape_cast %197 : vector<8x1xi1> to vector<8x1xi1>
      %199 = vector.broadcast %198 : vector<8x1xi1> to vector<8x128xi1>
      %200 = vector.broadcast %cst_72 : f32 to vector<8x128xf32>
      %201 = arith.select %199, %195, %200 : vector<8x128xi1>, vector<8x128xf32>
      %c3_73 = arith.constant 3 : index
      %c0_74 = arith.constant 0 : index
      %c0_75 = arith.constant 0 : index
      %202 = vector.load %arg9[%c3_73, %c0_74, %c0_75] : memref<8x8x128xf32, #tpu.memory_space<vmem>>, vector<1x8x128xf32>
      %203 = vector.shape_cast %202 : vector<1x8x128xf32> to vector<8x128xf32>
      %204 = vector.shape_cast %201 : vector<8x128xf32> to vector<1x8x128xf32>
      tpu.vector_store %arg9[%c3_73, %c0_74, %c0_75], %204 {strides = array<i32>} : memref<8x8x128xf32, #tpu.memory_space<vmem>>, vector<1x8x128xf32>,
      %205 = vector.shape_cast %197 : vector<8x1xi1> to vector<8x1xi1>
      %206 = vector.broadcast %205 : vector<8x1xi1> to vector<8x128xi1>
      %207 = arith.select %206, %195, %163 : vector<8x128xi1>, vector<8x128xf32>
      %c4 = arith.constant 4 : index
      %c0_76 = arith.constant 0 : index
      %c0_77 = arith.constant 0 : index
      %208 = vector.load %arg11[%c4, %c0_76, %c0_77] : memref<8x8x384xf32, #tpu.memory_space<vmem>>, vector<1x8x384xf32>
      %209 = vector.shape_cast %208 : vector<1x8x384xf32> to vector<8x384xf32>
      %cst_78 = arith.constant dense<0.000000e+00> : vector<8x384xf32>
      %210 = tpu.matmul %207, %24, %cst_78 {dimension_numbers = #tpu.dot_dimension_numbers<[1], [0], [0], [1], [0, 0, 1, 1], [], []>} : vector<8x128xf32>, vector<128x384xf32>, vector<8x384xf32> -> vector<8x384xf32>
      %211 = vector.extract_strided_slice %209 {offsets = [0, 0], sizes = [8, 128], strides = [1, 1]} : vector<8x384xf32> to vector<8x128xf32>
      %212 = vector.extract_strided_slice %210 {offsets = [0, 0], sizes = [8, 128], strides = [1, 1]} : vector<8x384xf32> to vector<8x128xf32>
      %213 = arith.addf %211, %212 : vector<8x128xf32>
      %cst_79 = arith.constant 5.000000e-01 : f32
      %214 = vector.broadcast %cst_79 : f32 to vector<8x128xf32>
      %215 = arith.mulf %214, %213 : vector<8x128xf32>
      %216 = math.tanh %215 : vector<8x128xf32>
      %cst_80 = arith.constant 5.000000e-01 : f32
      %217 = vector.broadcast %cst_80 : f32 to vector<8x128xf32>
      %218 = arith.mulf %217, %216 : vector<8x128xf32>
      %cst_81 = arith.constant 5.000000e-01 : f32
      %219 = vector.broadcast %cst_81 : f32 to vector<8x128xf32>
      %220 = arith.addf %218, %219 : vector<8x128xf32>
      %221 = vector.extract_strided_slice %209 {offsets = [0, 128], sizes = [8, 128], strides = [1, 1]} : vector<8x384xf32> to vector<8x128xf32>
      %222 = vector.extract_strided_slice %210 {offsets = [0, 128], sizes = [8, 128], strides = [1, 1]} : vector<8x384xf32> to vector<8x128xf32>
      %223 = arith.addf %221, %222 : vector<8x128xf32>
      %cst_82 = arith.constant 5.000000e-01 : f32
      %224 = vector.broadcast %cst_82 : f32 to vector<8x128xf32>
      %225 = arith.mulf %224, %223 : vector<8x128xf32>
      %226 = math.tanh %225 : vector<8x128xf32>
      %cst_83 = arith.constant 5.000000e-01 : f32
      %227 = vector.broadcast %cst_83 : f32 to vector<8x128xf32>
      %228 = arith.mulf %227, %226 : vector<8x128xf32>
      %cst_84 = arith.constant 5.000000e-01 : f32
      %229 = vector.broadcast %cst_84 : f32 to vector<8x128xf32>
      %230 = arith.addf %228, %229 : vector<8x128xf32>
      %231 = vector.extract_strided_slice %209 {offsets = [0, 256], sizes = [8, 128], strides = [1, 1]} : vector<8x384xf32> to vector<8x128xf32>
      %232 = vector.extract_strided_slice %210 {offsets = [0, 256], sizes = [8, 128], strides = [1, 1]} : vector<8x384xf32> to vector<8x128xf32>
      %233 = arith.addf %232, %31 : vector<8x128xf32>
      %234 = arith.mulf %220, %233 : vector<8x128xf32>
      %235 = arith.addf %231, %234 : vector<8x128xf32>
      %236 = math.tanh %235 : vector<8x128xf32>
      %237 = arith.subf %207, %236 : vector<8x128xf32>
      %238 = arith.mulf %230, %237 : vector<8x128xf32>
      %239 = arith.addf %236, %238 : vector<8x128xf32>
      %c4_i32 = arith.constant 4 : i32
      %240 = vector.broadcast %c4_i32 : i32 to vector<8x1xi32>
      %241 = arith.cmpi sgt, %28, %240 : vector<8x1xi32>
      %cst_85 = arith.constant 0.000000e+00 : f32
      %242 = vector.shape_cast %241 : vector<8x1xi1> to vector<8x1xi1>
      %243 = vector.broadcast %242 : vector<8x1xi1> to vector<8x128xi1>
      %244 = vector.broadcast %cst_85 : f32 to vector<8x128xf32>
      %245 = arith.select %243, %239, %244 : vector<8x128xi1>, vector<8x128xf32>
      %c4_86 = arith.constant 4 : index
      %c0_87 = arith.constant 0 : index
      %c0_88 = arith.constant 0 : index
      %246 = vector.load %arg9[%c4_86, %c0_87, %c0_88] : memref<8x8x128xf32, #tpu.memory_space<vmem>>, vector<1x8x128xf32>
      %247 = vector.shape_cast %246 : vector<1x8x128xf32> to vector<8x128xf32>
      %248 = vector.shape_cast %245 : vector<8x128xf32> to vector<1x8x128xf32>
      tpu.vector_store %arg9[%c4_86, %c0_87, %c0_88], %248 {strides = array<i32>} : memref<8x8x128xf32, #tpu.memory_space<vmem>>, vector<1x8x128xf32>,
      %249 = vector.shape_cast %241 : vector<8x1xi1> to vector<8x1xi1>
      %250 = vector.broadcast %249 : vector<8x1xi1> to vector<8x128xi1>
      %251 = arith.select %250, %239, %207 : vector<8x128xi1>, vector<8x128xf32>
      %c5 = arith.constant 5 : index
      %c0_89 = arith.constant 0 : index
      %c0_90 = arith.constant 0 : index
      %252 = vector.load %arg11[%c5, %c0_89, %c0_90] : memref<8x8x384xf32, #tpu.memory_space<vmem>>, vector<1x8x384xf32>
      %253 = vector.shape_cast %252 : vector<1x8x384xf32> to vector<8x384xf32>
      %cst_91 = arith.constant dense<0.000000e+00> : vector<8x384xf32>
      %254 = tpu.matmul %251, %24, %cst_91 {dimension_numbers = #tpu.dot_dimension_numbers<[1], [0], [0], [1], [0, 0, 1, 1], [], []>} : vector<8x128xf32>, vector<128x384xf32>, vector<8x384xf32> -> vector<8x384xf32>
      %255 = vector.extract_strided_slice %253 {offsets = [0, 0], sizes = [8, 128], strides = [1, 1]} : vector<8x384xf32> to vector<8x128xf32>
      %256 = vector.extract_strided_slice %254 {offsets = [0, 0], sizes = [8, 128], strides = [1, 1]} : vector<8x384xf32> to vector<8x128xf32>
      %257 = arith.addf %255, %256 : vector<8x128xf32>
      %cst_92 = arith.constant 5.000000e-01 : f32
      %258 = vector.broadcast %cst_92 : f32 to vector<8x128xf32>
      %259 = arith.mulf %258, %257 : vector<8x128xf32>
      %260 = math.tanh %259 : vector<8x128xf32>
      %cst_93 = arith.constant 5.000000e-01 : f32
      %261 = vector.broadcast %cst_93 : f32 to vector<8x128xf32>
      %262 = arith.mulf %261, %260 : vector<8x128xf32>
      %cst_94 = arith.constant 5.000000e-01 : f32
      %263 = vector.broadcast %cst_94 : f32 to vector<8x128xf32>
      %264 = arith.addf %262, %263 : vector<8x128xf32>
      %265 = vector.extract_strided_slice %253 {offsets = [0, 128], sizes = [8, 128], strides = [1, 1]} : vector<8x384xf32> to vector<8x128xf32>
      %266 = vector.extract_strided_slice %254 {offsets = [0, 128], sizes = [8, 128], strides = [1, 1]} : vector<8x384xf32> to vector<8x128xf32>
      %267 = arith.addf %265, %266 : vector<8x128xf32>
      %cst_95 = arith.constant 5.000000e-01 : f32
      %268 = vector.broadcast %cst_95 : f32 to vector<8x128xf32>
      %269 = arith.mulf %268, %267 : vector<8x128xf32>
      %270 = math.tanh %269 : vector<8x128xf32>
      %cst_96 = arith.constant 5.000000e-01 : f32
      %271 = vector.broadcast %cst_96 : f32 to vector<8x128xf32>
      %272 = arith.mulf %271, %270 : vector<8x128xf32>
      %cst_97 = arith.constant 5.000000e-01 : f32
      %273 = vector.broadcast %cst_97 : f32 to vector<8x128xf32>
      %274 = arith.addf %272, %273 : vector<8x128xf32>
      %275 = vector.extract_strided_slice %253 {offsets = [0, 256], sizes = [8, 128], strides = [1, 1]} : vector<8x384xf32> to vector<8x128xf32>
      %276 = vector.extract_strided_slice %254 {offsets = [0, 256], sizes = [8, 128], strides = [1, 1]} : vector<8x384xf32> to vector<8x128xf32>
      %277 = arith.addf %276, %31 : vector<8x128xf32>
      %278 = arith.mulf %264, %277 : vector<8x128xf32>
      %279 = arith.addf %275, %278 : vector<8x128xf32>
      %280 = math.tanh %279 : vector<8x128xf32>
      %281 = arith.subf %251, %280 : vector<8x128xf32>
      %282 = arith.mulf %274, %281 : vector<8x128xf32>
      %283 = arith.addf %280, %282 : vector<8x128xf32>
      %c5_i32 = arith.constant 5 : i32
      %284 = vector.broadcast %c5_i32 : i32 to vector<8x1xi32>
      %285 = arith.cmpi sgt, %28, %284 : vector<8x1xi32>
      %cst_98 = arith.constant 0.000000e+00 : f32
      %286 = vector.shape_cast %285 : vector<8x1xi1> to vector<8x1xi1>
      %287 = vector.broadcast %286 : vector<8x1xi1> to vector<8x128xi1>
      %288 = vector.broadcast %cst_98 : f32 to vector<8x128xf32>
      %289 = arith.select %287, %283, %288 : vector<8x128xi1>, vector<8x128xf32>
      %c5_99 = arith.constant 5 : index
      %c0_100 = arith.constant 0 : index
      %c0_101 = arith.constant 0 : index
      %290 = vector.load %arg9[%c5_99, %c0_100, %c0_101] : memref<8x8x128xf32, #tpu.memory_space<vmem>>, vector<1x8x128xf32>
      %291 = vector.shape_cast %290 : vector<1x8x128xf32> to vector<8x128xf32>
      %292 = vector.shape_cast %289 : vector<8x128xf32> to vector<1x8x128xf32>
      tpu.vector_store %arg9[%c5_99, %c0_100, %c0_101], %292 {strides = array<i32>} : memref<8x8x128xf32, #tpu.memory_space<vmem>>, vector<1x8x128xf32>,
      %293 = vector.shape_cast %285 : vector<8x1xi1> to vector<8x1xi1>
      %294 = vector.broadcast %293 : vector<8x1xi1> to vector<8x128xi1>
      %295 = arith.select %294, %283, %251 : vector<8x128xi1>, vector<8x128xf32>
      %c6 = arith.constant 6 : index
      %c0_102 = arith.constant 0 : index
      %c0_103 = arith.constant 0 : index
      %296 = vector.load %arg11[%c6, %c0_102, %c0_103] : memref<8x8x384xf32, #tpu.memory_space<vmem>>, vector<1x8x384xf32>
      %297 = vector.shape_cast %296 : vector<1x8x384xf32> to vector<8x384xf32>
      %cst_104 = arith.constant dense<0.000000e+00> : vector<8x384xf32>
      %298 = tpu.matmul %295, %24, %cst_104 {dimension_numbers = #tpu.dot_dimension_numbers<[1], [0], [0], [1], [0, 0, 1, 1], [], []>} : vector<8x128xf32>, vector<128x384xf32>, vector<8x384xf32> -> vector<8x384xf32>
      %299 = vector.extract_strided_slice %297 {offsets = [0, 0], sizes = [8, 128], strides = [1, 1]} : vector<8x384xf32> to vector<8x128xf32>
      %300 = vector.extract_strided_slice %298 {offsets = [0, 0], sizes = [8, 128], strides = [1, 1]} : vector<8x384xf32> to vector<8x128xf32>
      %301 = arith.addf %299, %300 : vector<8x128xf32>
      %cst_105 = arith.constant 5.000000e-01 : f32
      %302 = vector.broadcast %cst_105 : f32 to vector<8x128xf32>
      %303 = arith.mulf %302, %301 : vector<8x128xf32>
      %304 = math.tanh %303 : vector<8x128xf32>
      %cst_106 = arith.constant 5.000000e-01 : f32
      %305 = vector.broadcast %cst_106 : f32 to vector<8x128xf32>
      %306 = arith.mulf %305, %304 : vector<8x128xf32>
      %cst_107 = arith.constant 5.000000e-01 : f32
      %307 = vector.broadcast %cst_107 : f32 to vector<8x128xf32>
      %308 = arith.addf %306, %307 : vector<8x128xf32>
      %309 = vector.extract_strided_slice %297 {offsets = [0, 128], sizes = [8, 128], strides = [1, 1]} : vector<8x384xf32> to vector<8x128xf32>
      %310 = vector.extract_strided_slice %298 {offsets = [0, 128], sizes = [8, 128], strides = [1, 1]} : vector<8x384xf32> to vector<8x128xf32>
      %311 = arith.addf %309, %310 : vector<8x128xf32>
      %cst_108 = arith.constant 5.000000e-01 : f32
      %312 = vector.broadcast %cst_108 : f32 to vector<8x128xf32>
      %313 = arith.mulf %312, %311 : vector<8x128xf32>
      %314 = math.tanh %313 : vector<8x128xf32>
      %cst_109 = arith.constant 5.000000e-01 : f32
      %315 = vector.broadcast %cst_109 : f32 to vector<8x128xf32>
      %316 = arith.mulf %315, %314 : vector<8x128xf32>
      %cst_110 = arith.constant 5.000000e-01 : f32
      %317 = vector.broadcast %cst_110 : f32 to vector<8x128xf32>
      %318 = arith.addf %316, %317 : vector<8x128xf32>
      %319 = vector.extract_strided_slice %297 {offsets = [0, 256], sizes = [8, 128], strides = [1, 1]} : vector<8x384xf32> to vector<8x128xf32>
      %320 = vector.extract_strided_slice %298 {offsets = [0, 256], sizes = [8, 128], strides = [1, 1]} : vector<8x384xf32> to vector<8x128xf32>
      %321 = arith.addf %320, %31 : vector<8x128xf32>
      %322 = arith.mulf %308, %321 : vector<8x128xf32>
      %323 = arith.addf %319, %322 : vector<8x128xf32>
      %324 = math.tanh %323 : vector<8x128xf32>
      %325 = arith.subf %295, %324 : vector<8x128xf32>
      %326 = arith.mulf %318, %325 : vector<8x128xf32>
      %327 = arith.addf %324, %326 : vector<8x128xf32>
      %c6_i32 = arith.constant 6 : i32
      %328 = vector.broadcast %c6_i32 : i32 to vector<8x1xi32>
      %329 = arith.cmpi sgt, %28, %328 : vector<8x1xi32>
      %cst_111 = arith.constant 0.000000e+00 : f32
      %330 = vector.shape_cast %329 : vector<8x1xi1> to vector<8x1xi1>
      %331 = vector.broadcast %330 : vector<8x1xi1> to vector<8x128xi1>
      %332 = vector.broadcast %cst_111 : f32 to vector<8x128xf32>
      %333 = arith.select %331, %327, %332 : vector<8x128xi1>, vector<8x128xf32>
      %c6_112 = arith.constant 6 : index
      %c0_113 = arith.constant 0 : index
      %c0_114 = arith.constant 0 : index
      %334 = vector.load %arg9[%c6_112, %c0_113, %c0_114] : memref<8x8x128xf32, #tpu.memory_space<vmem>>, vector<1x8x128xf32>
      %335 = vector.shape_cast %334 : vector<1x8x128xf32> to vector<8x128xf32>
      %336 = vector.shape_cast %333 : vector<8x128xf32> to vector<1x8x128xf32>
      tpu.vector_store %arg9[%c6_112, %c0_113, %c0_114], %336 {strides = array<i32>} : memref<8x8x128xf32, #tpu.memory_space<vmem>>, vector<1x8x128xf32>,
      %337 = vector.shape_cast %329 : vector<8x1xi1> to vector<8x1xi1>
      %338 = vector.broadcast %337 : vector<8x1xi1> to vector<8x128xi1>
      %339 = arith.select %338, %327, %295 : vector<8x128xi1>, vector<8x128xf32>
      %c7 = arith.constant 7 : index
      %c0_115 = arith.constant 0 : index
      %c0_116 = arith.constant 0 : index
      %340 = vector.load %arg11[%c7, %c0_115, %c0_116] : memref<8x8x384xf32, #tpu.memory_space<vmem>>, vector<1x8x384xf32>
      %341 = vector.shape_cast %340 : vector<1x8x384xf32> to vector<8x384xf32>
      %cst_117 = arith.constant dense<0.000000e+00> : vector<8x384xf32>
      %342 = tpu.matmul %339, %24, %cst_117 {dimension_numbers = #tpu.dot_dimension_numbers<[1], [0], [0], [1], [0, 0, 1, 1], [], []>} : vector<8x128xf32>, vector<128x384xf32>, vector<8x384xf32> -> vector<8x384xf32>
      %343 = vector.extract_strided_slice %341 {offsets = [0, 0], sizes = [8, 128], strides = [1, 1]} : vector<8x384xf32> to vector<8x128xf32>
      %344 = vector.extract_strided_slice %342 {offsets = [0, 0], sizes = [8, 128], strides = [1, 1]} : vector<8x384xf32> to vector<8x128xf32>
      %345 = arith.addf %343, %344 : vector<8x128xf32>
      %cst_118 = arith.constant 5.000000e-01 : f32
      %346 = vector.broadcast %cst_118 : f32 to vector<8x128xf32>
      %347 = arith.mulf %346, %345 : vector<8x128xf32>
      %348 = math.tanh %347 : vector<8x128xf32>
      %cst_119 = arith.constant 5.000000e-01 : f32
      %349 = vector.broadcast %cst_119 : f32 to vector<8x128xf32>
      %350 = arith.mulf %349, %348 : vector<8x128xf32>
      %cst_120 = arith.constant 5.000000e-01 : f32
      %351 = vector.broadcast %cst_120 : f32 to vector<8x128xf32>
      %352 = arith.addf %350, %351 : vector<8x128xf32>
      %353 = vector.extract_strided_slice %341 {offsets = [0, 128], sizes = [8, 128], strides = [1, 1]} : vector<8x384xf32> to vector<8x128xf32>
      %354 = vector.extract_strided_slice %342 {offsets = [0, 128], sizes = [8, 128], strides = [1, 1]} : vector<8x384xf32> to vector<8x128xf32>
      %355 = arith.addf %353, %354 : vector<8x128xf32>
      %cst_121 = arith.constant 5.000000e-01 : f32
      %356 = vector.broadcast %cst_121 : f32 to vector<8x128xf32>
      %357 = arith.mulf %356, %355 : vector<8x128xf32>
      %358 = math.tanh %357 : vector<8x128xf32>
      %cst_122 = arith.constant 5.000000e-01 : f32
      %359 = vector.broadcast %cst_122 : f32 to vector<8x128xf32>
      %360 = arith.mulf %359, %358 : vector<8x128xf32>
      %cst_123 = arith.constant 5.000000e-01 : f32
      %361 = vector.broadcast %cst_123 : f32 to vector<8x128xf32>
      %362 = arith.addf %360, %361 : vector<8x128xf32>
      %363 = vector.extract_strided_slice %341 {offsets = [0, 256], sizes = [8, 128], strides = [1, 1]} : vector<8x384xf32> to vector<8x128xf32>
      %364 = vector.extract_strided_slice %342 {offsets = [0, 256], sizes = [8, 128], strides = [1, 1]} : vector<8x384xf32> to vector<8x128xf32>
      %365 = arith.addf %364, %31 : vector<8x128xf32>
      %366 = arith.mulf %352, %365 : vector<8x128xf32>
      %367 = arith.addf %363, %366 : vector<8x128xf32>
      %368 = math.tanh %367 : vector<8x128xf32>
      %369 = arith.subf %339, %368 : vector<8x128xf32>
      %370 = arith.mulf %362, %369 : vector<8x128xf32>
      %371 = arith.addf %368, %370 : vector<8x128xf32>
      %c7_i32 = arith.constant 7 : i32
      %372 = vector.broadcast %c7_i32 : i32 to vector<8x1xi32>
      %373 = arith.cmpi sgt, %28, %372 : vector<8x1xi32>
      %cst_124 = arith.constant 0.000000e+00 : f32
      %374 = vector.shape_cast %373 : vector<8x1xi1> to vector<8x1xi1>
      %375 = vector.broadcast %374 : vector<8x1xi1> to vector<8x128xi1>
      %376 = vector.broadcast %cst_124 : f32 to vector<8x128xf32>
      %377 = arith.select %375, %371, %376 : vector<8x128xi1>, vector<8x128xf32>
      %c7_125 = arith.constant 7 : index
      %c0_126 = arith.constant 0 : index
      %c0_127 = arith.constant 0 : index
      %378 = vector.load %arg9[%c7_125, %c0_126, %c0_127] : memref<8x8x128xf32, #tpu.memory_space<vmem>>, vector<1x8x128xf32>
      %379 = vector.shape_cast %378 : vector<1x8x128xf32> to vector<8x128xf32>
      %380 = vector.shape_cast %377 : vector<8x128xf32> to vector<1x8x128xf32>
      tpu.vector_store %arg9[%c7_125, %c0_126, %c0_127], %380 {strides = array<i32>} : memref<8x8x128xf32, #tpu.memory_space<vmem>>, vector<1x8x128xf32>,
      %381 = vector.shape_cast %373 : vector<8x1xi1> to vector<8x1xi1>
      %382 = vector.broadcast %381 : vector<8x1xi1> to vector<8x128xi1>
      %383 = arith.select %382, %371, %339 : vector<8x128xi1>, vector<8x128xf32>
      %c0_128 = arith.constant 0 : index
      %c0_129 = arith.constant 0 : index
      %384 = vector.load %arg12[%c0_128, %c0_129] : memref<8x128xf32, #tpu.memory_space<vmem>>, vector<8x128xf32>
      tpu.vector_store %arg12[%c0_128, %c0_129], %383 {strides = array<i32>} : memref<8x128xf32, #tpu.memory_space<vmem>>, vector<8x128xf32>,
    } else {
    }
    %true = arith.constant true
    %9 = arith.xori %6, %true : i1
    %10 = arith.extui %9 : i1 to i32
    %c0_i32_2 = arith.constant 0 : i32
    %11 = arith.cmpi ne, %10, %c0_i32_2 : i32
    scf.if %11 {
      %cst = arith.constant 0.000000e+00 : f32
      %15 = vector.broadcast %cst : f32 to vector<8x8x128xf32>
      %c0 = arith.constant 0 : index
      %c0_5 = arith.constant 0 : index
      %c0_6 = arith.constant 0 : index
      %16 = vector.load %arg9[%c0, %c0_5, %c0_6] : memref<8x8x128xf32, #tpu.memory_space<vmem>>, vector<8x8x128xf32>
      tpu.vector_store %arg9[%c0, %c0_5, %c0_6], %15 {strides = array<i32>} : memref<8x8x128xf32, #tpu.memory_space<vmem>>, vector<8x8x128xf32>,
    } else {
    }
    %c0_i32_3 = arith.constant 0 : i32
    %12 = arith.cmpi eq, %arg1, %c0_i32_3 : i32
    %13 = arith.extui %12 : i1 to i32
    %c0_i32_4 = arith.constant 0 : i32
    %14 = arith.cmpi ne, %13, %c0_i32_4 : i32
    scf.if %14 {
      %c0 = arith.constant 0 : index
      %c0_5 = arith.constant 0 : index
      %15 = vector.load %arg12[%c0, %c0_5] : memref<8x128xf32, #tpu.memory_space<vmem>>, vector<8x128xf32>
      %c0_6 = arith.constant 0 : index
      %c0_7 = arith.constant 0 : index
      %16 = vector.load %arg10[%c0_6, %c0_7] : memref<8x128xf32, #tpu.memory_space<vmem>>, vector<8x128xf32>
      tpu.vector_store %arg10[%c0_6, %c0_7], %15 {strides = array<i32>} : memref<8x128xf32, #tpu.memory_space<vmem>>, vector<8x128xf32>,
    } else {
    }
    return
  }
  func.func @transform_0(%arg0: i32, %arg1: i32) -> i32 {
    %c0_i32 = arith.constant 0 : i32
    %c0_i32_0 = arith.constant 0 : i32
    return %c0_i32 : i32
  }
  func.func @transform_1(%arg0: i32, %arg1: i32) -> (i32, i32) {
    %c0_i32 = arith.constant 0 : i32
    %c0_i32_0 = arith.constant 0 : i32
    return %arg0, %c0_i32 : i32, i32
  }
  func.func @transform_2(%arg0: i32, %arg1: i32) -> (i32, i32, i32) {
    %c0_i32 = arith.constant 0 : i32
    %c0_i32_0 = arith.constant 0 : i32
    return %arg1, %arg0, %c0_i32 : i32, i32, i32
  }
  func.func @transform_3(%arg0: i32, %arg1: i32) -> (i32, i32) {
    %c0_i32 = arith.constant 0 : i32
    %c0_i32_0 = arith.constant 0 : i32
    %c0_i32_1 = arith.constant 0 : i32
    return %c0_i32, %c0_i32_0 : i32, i32
  }
  func.func @transform_4(%arg0: i32, %arg1: i32) -> (i32, i32) {
    %c0_i32 = arith.constant 0 : i32
    %c0_i32_0 = arith.constant 0 : i32
    %c0_i32_1 = arith.constant 0 : i32
    return %c0_i32, %c0_i32_0 : i32, i32
  }
  func.func @transform_5(%arg0: i32, %arg1: i32) -> (i32, i32) {
    %c0_i32 = arith.constant 0 : i32
    %c0_i32_0 = arith.constant 0 : i32
    %c0_i32_1 = arith.constant 0 : i32
    return %c0_i32, %c0_i32_0 : i32, i32
  }
  func.func @transform_6(%arg0: i32, %arg1: i32) -> (i32, i32) {
    %c0_i32 = arith.constant 0 : i32
    %c0_i32_0 = arith.constant 0 : i32
    %c0_i32_1 = arith.constant 0 : i32
    return %c0_i32, %c0_i32_0 : i32, i32
  }
  func.func @transform_7(%arg0: i32, %arg1: i32) -> (i32, i32, i32) {
    %c0_i32 = arith.constant 0 : i32
    %c0_i32_0 = arith.constant 0 : i32
    return %arg1, %arg0, %c0_i32 : i32, i32, i32
  }
  func.func @transform_8(%arg0: i32, %arg1: i32) -> (i32, i32) {
    %c0_i32 = arith.constant 0 : i32
    %c0_i32_0 = arith.constant 0 : i32
    return %arg0, %c0_i32 : i32, i32
  }
}

</mosaic_0001>

<llo_original>
// kernel: _encoder_pallas.1
$region0: #{_encoder_pallas.1}
  #allocation0 [shape = 'u32[]', space=smem, size = 0x4, offset = 0x4, fixed_abs, tag = 'smem constant byte address 0x4 - core index']
  #allocation1 [shape = 'u32[144,128]{1,0:T(1,128)}', space=vmem, size = 0x12000, scoped, tag = 'internal scratch']
  #allocation2 [shape = 'f32[8,8,384]{2,1,0:T(8,128)}', space=vmem, size = 0x18000, scoped, tag = 'scratch operand']
  #allocation3 [shape = 'f32[8,128]{1,0:T(8,128)}', space=vmem, size = 0x1000, scoped, tag = 'scratch operand']
  #allocation4 [shape = 's32[1]{0:T(128)S(6)}', space=smem, size = 0x200, scoped, tag = 'scoped memory for _encoder_pallas.1']
  %s0 = inlined_call_operand.<no memory space> [shape: s32[1], index: 0, kind: input, shape index: {}]
  %s1 = inlined_call_operand.vmem [shape: s32[8,1], index: 1, kind: input, shape index: {}]
  %s2 = inlined_call_operand.vmem [shape: f32[8,8,3], index: 2, kind: input, shape index: {}]
  %s3 = inlined_call_operand.vmem [shape: f32[3,384], index: 3, kind: input, shape index: {}]
  %s4 = inlined_call_operand.hbm [shape: f32[128,384], index: 4, kind: input, shape index: {}]
  %s5 = inlined_call_operand.vmem [shape: f32[1,384], index: 5, kind: input, shape index: {}]
  %s6 = inlined_call_operand.vmem [shape: f32[1,128], index: 6, kind: input, shape index: {}]
  %s7 = inlined_call_operand.vmem [shape: f32[8,8,128], index: 7, kind: output, shape index: {0}]
  %s8 = inlined_call_operand.vmem [shape: f32[8,128], index: 8, kind: output, shape index: {1}]
  %9 = xla_tuple %s7, %s8
  %s10 = sld [smem:[#allocation0]]
  $region66: #{_encoder_pallas.1} parent=0
    _
  %s12 = ssub.s32 1, %s10
  %s13 = scalar_select 0, %s12, %s10
  %14 = sst [smem:[#allocation4]] %s0
  $region1: #{_encoder_pallas.1} parent=0
    #allocation5 [shape = 'u8[196608]{0}', space=vmem, size = 0x30000, scoped, tag = 'input window, operand 4, single buffered']
    #allocation6 [shape = 's32[1]{0}', space=sflag, size = 0x4, scoped, tag = 'scoped memory for _encoder_pallas.1']
    %15 = vsyncpa [#allocation6], 0
    // Predicated region
    $region2: #{_encoder_pallas.1} parent=1 // pred_check
      _
    $region3: #{_encoder_pallas.1} parent=1 // pred_check_branch
      %17 = sbr.rel (0) target = $region5
    $region4: #{_encoder_pallas.1} parent=1 // pred_region
      _
    $region5: #{_encoder_pallas.1} parent=1 // pred_fallthru
      _
    // Predicated region
    $region6: #{_encoder_pallas.1} parent=1 // pred_check
      _
    $region7: #{_encoder_pallas.1} parent=1 // pred_check_branch
      %19 = sbr.rel (0) target = $region9
    $region8: #{_encoder_pallas.1} parent=1 // pred_region
      _
    $region9: #{_encoder_pallas.1} parent=1 // pred_fallthru
      _
    // Predicated region
    $region10: #{_encoder_pallas.1} parent=1 // pred_check
      _
    $region11: #{_encoder_pallas.1} parent=1 // pred_check_branch
      %21 = sbr.rel (0) target = $region13
    $region12: #{_encoder_pallas.1} parent=1 // pred_region
      _
    $region13: #{_encoder_pallas.1} parent=1 // pred_fallthru
      _
    // Predicated region
    $region14: #{_encoder_pallas.1} parent=1 // pred_check
      _
    $region15: #{_encoder_pallas.1} parent=1 // pred_check_branch
      %23 = sbr.rel (0) target = $region17
    $region16: #{_encoder_pallas.1} parent=1 // pred_region
      _
    $region17: #{_encoder_pallas.1} parent=1 // pred_fallthru
      _
    // Predicated region
    $region18: #{_encoder_pallas.1} parent=1 // pred_check
      _
    $region19: #{_encoder_pallas.1} parent=1 // pred_check_branch
      %25 = sbr.rel (0) target = $region21
    $region20: #{_encoder_pallas.1} parent=1 // pred_region
      %s27 = ssub.s32 6144, 6144
      %28 = vsyncadd [#allocation6], %s27
      %s29 = sshll.u32 [#allocation5], 4
      %s30 = int_to_ptr.vmem [resolvable:$true] %s29
      %35 = dma.hbm_to_vmem [thread:$0]  %s4, 6144, %s30, [#allocation6], 384, 384, 24
    $region21: #{_encoder_pallas.1} parent=1 // pred_fallthru
      _
    // Predicated region
    $region22: #{_encoder_pallas.1} parent=1 // pred_check
      _
    $region23: #{_encoder_pallas.1} parent=1 // pred_check_branch
      %37 = sbr.rel (0) target = $region25
    $region24: #{_encoder_pallas.1} parent=1 // pred_region
      _
    $region25: #{_encoder_pallas.1} parent=1 // pred_fallthru
      _
    // Predicated region
    $region26: #{_encoder_pallas.1} parent=1 // pred_check
      _
    $region27: #{_encoder_pallas.1} parent=1 // pred_check_branch
      %39 = sbr.rel (0) target = $region29
    $region28: #{_encoder_pallas.1} parent=1 // pred_region
      _
    $region29: #{_encoder_pallas.1} parent=1 // pred_fallthru
      _
    // Predicated region
    $region30: #{_encoder_pallas.1} parent=1 // pred_check
      _
    $region31: #{_encoder_pallas.1} parent=1 // pred_check_branch
      %41 = sbr.rel (0) target = $region33
    $region32: #{_encoder_pallas.1} parent=1 // pred_region
      %42 = dma.done [#allocation6], 6144
    $region33: #{_encoder_pallas.1} parent=1 // pred_fallthru
      _
    %s43 = smul.u32 0, 8
    %p44 = scmp.eq.s32.totalorder 0, 0
    // Predicated region
    $region34: #{_encoder_pallas.1} parent=1 // pred_check
      %p45 = pneg %p44
    $region35: #{_encoder_pallas.1} parent=1 // pred_check_branch
      %47 = sbr.rel (%p45) target = $region37
    $region36: #{_encoder_pallas.1} parent=1 // pred_region
      %48 = vst [vmem:[#allocation3] sm:$0xff] 0.0
    $region37: #{_encoder_pallas.1} parent=1 // pred_fallthru
      _
    %s49 = sld [smem:[#allocation4]]
    %p50 = scmp.lt.s32.totalorder %s43, %s49
    // Predicated region
    $region38: #{_encoder_pallas.1} parent=1 // pred_check
      %p51 = pneg %p50
    $region39: #{_encoder_pallas.1} parent=1 // pred_check_branch
      %53 = sbr.rel (%p51) target = $region41
    $region40: #{_encoder_pallas.1} parent=1 // pred_region
      %v54 = vld [vmem:[%s2] sm:$0xff]
      %v55 = vld [vmem:[%s2 + $0x8] sm:$0xff]
      %v56 = vld [vmem:[%s2 + $0x10] sm:$0xff]
      %v57 = vld [vmem:[%s2 + $0x18] sm:$0xff]
      %v58 = vld [vmem:[%s2 + $0x20] sm:$0xff]
      %v59 = vld [vmem:[%s2 + $0x28] sm:$0xff]
      %v60 = vld [vmem:[%s2 + $0x30] sm:$0xff]
      %v61 = vld [vmem:[%s2 + $0x38] sm:$0xff]
      %v62 = vld [vmem:[%s3] sm:$0x77]
      %v63 = vld [vmem:[%s3 + $0x8] sm:$0x7]
      %v64 = vld [vmem:[%s5] sm:$0x7]
      %v66 = vlaneseq
      %v67 = vshrl.u32 %v66, 7
      %v68 = vsub.s32 0, %v67
      %v69 = vrot.slane %v64, %v68
      %v70 = vlaneseq
      %v71 = vshrl.u32 %v70, 7
      %v72 = vsub.s32 1, %v71
      %v73 = vrot.slane %v64, %v72
      %v74 = vlaneseq
      %v75 = vshrl.u32 %v74, 7
      %v76 = vsub.s32 2, %v75
      %v77 = vrot.slane %v64, %v76
      %v83 = vcombine.high %v62, %v62
      %vm84 = vcmask 23552
      %v86 = vsel %vm84, %v54, 0
      %v89 = vsel %vm84, %v55, 0
      %v92 = vsel %vm84, %v56, 0
      %v95 = vsel %vm84, %v57, 0
      %v98 = vsel %vm84, %v58, 0
      %v101 = vsel %vm84, %v59, 0
      %v104 = vsel %vm84, %v60, 0
      %v107 = vsel %vm84, %v61, 0
      %vm109 = vcmask 1042432
      %v110 = vsel %vm109, %v62, 0
      %v112 = vsel %vm109, %v83, 0
      %v114 = vsel %vm109, %v63, 0
      %116 = vmatprep.subr.mxu0 0.0
      %117 = vmatpush1.msra.mxu0 0.0
      %118 = vmatprep.subr.mxu0 0.0
      %119 = vmatpush1.msra.mxu0 0.0
      %120 = vmatprep.subr.mxu0 0.0
      %121 = vmatpush1.msra.mxu0 0.0
      %122 = vmatprep.subr.mxu0 0.0
      %123 = vmatpush1.msra.mxu0 0.0
      %124 = vmatprep.subr.mxu0 0.0
      %125 = vmatpush1.msra.mxu0 0.0
      %126 = vmatprep.subr.mxu0 0.0
      %127 = vmatpush1.msra.mxu0 0.0
      %128 = vmatprep.subr.mxu0 0.0
      %129 = vmatpush1.msra.mxu0 0.0
      %130 = vmatprep.subr.mxu0 0.0
      %131 = vmatpush1.msra.mxu0 0.0
      %132 = vmatprep.subr.mxu0 0.0
      %133 = vmatpush1.msra.mxu0 0.0
      %134 = vmatprep.subr.mxu0 0.0
      %135 = vmatpush1.msra.mxu0 0.0
      %136 = vmatprep.subr.mxu0 0.0
      %137 = vmatpush1.msra.mxu0 0.0
      %138 = vmatprep.subr.mxu0 0.0
      %139 = vmatpush1.msra.mxu0 0.0
      %140 = vmatprep.subr.mxu0 0.0
      %141 = vmatpush1.msra.mxu0 0.0
      %142 = vmatprep.subr.mxu0 0.0
      %143 = vmatpush1.msra.mxu0 0.0
      %144 = vmatprep.subr.mxu0 0.0
      %145 = vmatpush1.msra.mxu0 0.0
      %146 = vmatprep.subr.mxu0 %v112
      %147 = vmatpush1.msra.mxu0 %v110
      %148 = vmatprep.subr.mxu0 0.0
      %149 = vmatpush2.msra.mxu0 0.0
      %150 = vmatprep.subr.mxu0 0.0
      %151 = vmatpush2.msra.mxu0 0.0
      %152 = vmatprep.subr.mxu0 0.0
      %153 = vmatpush2.msra.mxu0 0.0
      %154 = vmatprep.subr.mxu0 0.0
      %155 = vmatpush2.msra.mxu0 0.0
      %156 = vmatprep.subr.mxu0 0.0
      %157 = vmatpush2.msra.mxu0 0.0
      %158 = vmatprep.subr.mxu0 0.0
      %159 = vmatpush2.msra.mxu0 0.0
      %160 = vmatprep.subr.mxu0 0.0
      %161 = vmatpush2.msra.mxu0 0.0
      %162 = vmatprep.subr.mxu0 0.0
      %163 = vmatpush2.msra.mxu0 0.0
      %164 = vmatprep.subr.mxu0 0.0
      %165 = vmatpush2.msra.mxu0 0.0
      %166 = vmatprep.subr.mxu0 0.0
      %167 = vmatpush2.msra.mxu0 0.0
      %168 = vmatprep.subr.mxu0 0.0
      %169 = vmatpush2.msra.mxu0 0.0
      %170 = vmatprep.subr.mxu0 0.0
      %171 = vmatpush2.msra.mxu0 0.0
      %172 = vmatprep.subr.mxu0 0.0
      %173 = vmatpush2.msra.mxu0 0.0
      %174 = vmatprep.subr.mxu0 0.0
      %175 = vmatpush2.msra.mxu0 0.0
      %176 = vmatprep.subr.mxu0 0.0
      %177 = vmatpush2.msra.mxu0 0.0
      %178 = vmatprep.subr.mxu0 0.0
      %179 = vmatpush2.msra.mxu0 0.0
      %180 = vmatprep.mubr.f32.mxu0 0.0
      %181 = vmatmul.mubr.f32.gmra.mxu0 %v86
      %v182 = vpop.f32.mrf.mxu0
      %v183 = vadd.f32 %v69, %v182
      %v184 = vpop.f32.mrf.mxu0
      %v185 = vadd.f32 %v73, %v184
      %186 = vmatprep.mubr.f32.mxu0 0.0
      %187 = vmatmul.mubr.f32.gmra.mxu0 %v89
      %v188 = vpop.f32.mrf.mxu0
      %v189 = vadd.f32 %v69, %v188
      %v190 = vpop.f32.mrf.mxu0
      %v191 = vadd.f32 %v73, %v190
      %192 = vmatprep.mubr.f32.mxu0 0.0
      %193 = vmatmul.mubr.f32.gmra.mxu0 %v92
      %v194 = vpop.f32.mrf.mxu0
      %v195 = vadd.f32 %v69, %v194
      %v196 = vpop.f32.mrf.mxu0
      %v197 = vadd.f32 %v73, %v196
      %198 = vmatprep.mubr.f32.mxu0 0.0
      %199 = vmatmul.mubr.f32.gmra.mxu0 %v95
      %v200 = vpop.f32.mrf.mxu0
      %v201 = vadd.f32 %v69, %v200
      %v202 = vpop.f32.mrf.mxu0
      %v203 = vadd.f32 %v73, %v202
      %204 = vmatprep.mubr.f32.mxu0 0.0
      %205 = vmatmul.mubr.f32.gmra.mxu0 %v98
      %v206 = vpop.f32.mrf.mxu0
      %v207 = vadd.f32 %v69, %v206
      %v208 = vpop.f32.mrf.mxu0
      %v209 = vadd.f32 %v73, %v208
      %210 = vmatprep.mubr.f32.mxu0 0.0
      %211 = vmatmul.mubr.f32.gmra.mxu0 %v101
      %v212 = vpop.f32.mrf.mxu0
      %v213 = vadd.f32 %v69, %v212
      %v214 = vpop.f32.mrf.mxu0
      %v215 = vadd.f32 %v73, %v214
      %216 = vmatprep.mubr.f32.mxu0 0.0
      %217 = vmatmul.mubr.f32.gmra.mxu0 %v104
      %v218 = vpop.f32.mrf.mxu0
      %v219 = vadd.f32 %v69, %v218
      %v220 = vpop.f32.mrf.mxu0
      %v221 = vadd.f32 %v73, %v220
      %222 = vmatprep.mubr.f32.mxu0 0.0
      %223 = vmatmul.mubr.f32.gmra.mxu0 %v107
      %v224 = vpop.f32.mrf.mxu0
      %v225 = vadd.f32 %v69, %v224
      %v226 = vpop.f32.mrf.mxu0
      %v227 = vadd.f32 %v73, %v226
      %228 = vdwg.mxu0
      %229 = vmatprep.subr.mxu0 0.0
      %230 = vmatpush1.msra.mxu0 0.0
      %231 = vmatprep.subr.mxu0 0.0
      %232 = vmatpush1.msra.mxu0 0.0
      %233 = vmatprep.subr.mxu0 0.0
      %234 = vmatpush1.msra.mxu0 0.0
      %235 = vmatprep.subr.mxu0 0.0
      %236 = vmatpush1.msra.mxu0 0.0
      %237 = vmatprep.subr.mxu0 0.0
      %238 = vmatpush1.msra.mxu0 0.0
      %239 = vmatprep.subr.mxu0 0.0
      %240 = vmatpush1.msra.mxu0 0.0
      %241 = vmatprep.subr.mxu0 0.0
      %242 = vmatpush1.msra.mxu0 0.0
      %243 = vmatprep.subr.mxu0 0.0
      %244 = vmatpush1.msra.mxu0 0.0
      %245 = vmatprep.subr.mxu0 0.0
      %246 = vmatpush1.msra.mxu0 0.0
      %247 = vmatprep.subr.mxu0 0.0
      %248 = vmatpush1.msra.mxu0 0.0
      %249 = vmatprep.subr.mxu0 0.0
      %250 = vmatpush1.msra.mxu0 0.0
      %251 = vmatprep.subr.mxu0 0.0
      %252 = vmatpush1.msra.mxu0 0.0
      %253 = vmatprep.subr.mxu0 0.0
      %254 = vmatpush1.msra.mxu0 0.0
      %255 = vmatprep.subr.mxu0 0.0
      %256 = vmatpush1.msra.mxu0 0.0
      %257 = vmatprep.subr.mxu0 0.0
      %258 = vmatpush1.msra.mxu0 0.0
      %259 = vmatprep.subr.mxu0 0.0
      %260 = vmatpush1.msra.mxu0 %v114
      %261 = vmatprep.subr.mxu0 0.0
      %262 = vmatpush2.msra.mxu0 0.0
      %263 = vmatprep.subr.mxu0 0.0
      %264 = vmatpush2.msra.mxu0 0.0
      %265 = vmatprep.subr.mxu0 0.0
      %266 = vmatpush2.msra.mxu0 0.0
      %267 = vmatprep.subr.mxu0 0.0
      %268 = vmatpush2.msra.mxu0 0.0
      %269 = vmatprep.subr.mxu0 0.0
      %270 = vmatpush2.msra.mxu0 0.0
      %271 = vmatprep.subr.mxu0 0.0
      %272 = vmatpush2.msra.mxu0 0.0
      %273 = vmatprep.subr.mxu0 0.0
      %274 = vmatpush2.msra.mxu0 0.0
      %275 = vmatprep.subr.mxu0 0.0
      %276 = vmatpush2.msra.mxu0 0.0
      %277 = vmatprep.subr.mxu0 0.0
      %278 = vmatpush2.msra.mxu0 0.0
      %279 = vmatprep.subr.mxu0 0.0
      %280 = vmatpush2.msra.mxu0 0.0
      %281 = vmatprep.subr.mxu0 0.0
      %282 = vmatpush2.msra.mxu0 0.0
      %283 = vmatprep.subr.mxu0 0.0
      %284 = vmatpush2.msra.mxu0 0.0
      %285 = vmatprep.subr.mxu0 0.0
      %286 = vmatpush2.msra.mxu0 0.0
      %287 = vmatprep.subr.mxu0 0.0
      %288 = vmatpush2.msra.mxu0 0.0
      %289 = vmatprep.subr.mxu0 0.0
      %290 = vmatpush2.msra.mxu0 0.0
      %291 = vmatprep.subr.mxu0 0.0
      %292 = vmatpush2.msra.mxu0 0.0
      %293 = vmatprep.mubr.f32.mxu0 0.0
      %294 = vmatmul.mubr.f32.gmra.mxu0 %v86
      %v295 = vpop.f32.mrf.mxu0
      %v296 = vadd.f32 %v77, %v295
      %v297 = vpop.f32.mrf.mxu0
      %298 = vmatprep.mubr.f32.mxu0 0.0
      %299 = vmatmul.mubr.f32.gmra.mxu0 %v89
      %v300 = vpop.f32.mrf.mxu0
      %v301 = vadd.f32 %v77, %v300
      %v302 = vpop.f32.mrf.mxu0
      %303 = vmatprep.mubr.f32.mxu0 0.0
      %304 = vmatmul.mubr.f32.gmra.mxu0 %v92
      %v305 = vpop.f32.mrf.mxu0
      %v306 = vadd.f32 %v77, %v305
      %v307 = vpop.f32.mrf.mxu0
      %308 = vmatprep.mubr.f32.mxu0 0.0
      %309 = vmatmul.mubr.f32.gmra.mxu0 %v95
      %v310 = vpop.f32.mrf.mxu0
      %v311 = vadd.f32 %v77, %v310
      %v312 = vpop.f32.mrf.mxu0
      %313 = vmatprep.mubr.f32.mxu0 0.0
      %314 = vmatmul.mubr.f32.gmra.mxu0 %v98
      %v315 = vpop.f32.mrf.mxu0
      %v316 = vadd.f32 %v77, %v315
      %v317 = vpop.f32.mrf.mxu0
      %318 = vmatprep.mubr.f32.mxu0 0.0
      %319 = vmatmul.mubr.f32.gmra.mxu0 %v101
      %v320 = vpop.f32.mrf.mxu0
      %v321 = vadd.f32 %v77, %v320
      %v322 = vpop.f32.mrf.mxu0
      %323 = vmatprep.mubr.f32.mxu0 0.0
      %324 = vmatmul.mubr.f32.gmra.mxu0 %v104
      %v325 = vpop.f32.mrf.mxu0
      %v326 = vadd.f32 %v77, %v325
      %v327 = vpop.f32.mrf.mxu0
      %328 = vmatprep.mubr.f32.mxu0 0.0
      %329 = vmatmul.mubr.f32.gmra.mxu0 %v107
      %v330 = vpop.f32.mrf.mxu0
      %v331 = vadd.f32 %v77, %v330
      %v332 = vpop.f32.mrf.mxu0
      %333 = vdwg.mxu0
      %334 = vst [vmem:[#allocation2] sm:$0xff] %v183
      %335 = vst [vmem:[#allocation2 + $0x8] sm:$0xff] %v185
      %336 = vst [vmem:[#allocation2 + $0x10] sm:$0xff] %v296
      %337 = vst [vmem:[#allocation2 + $0x18] sm:$0xff] %v189
      %338 = vst [vmem:[#allocation2 + $0x20] sm:$0xff] %v191
      %339 = vst [vmem:[#allocation2 + $0x28] sm:$0xff] %v301
      %340 = vst [vmem:[#allocation2 + $0x30] sm:$0xff] %v195
      %341 = vst [vmem:[#allocation2 + $0x38] sm:$0xff] %v197
      %342 = vst [vmem:[#allocation2 + $0x40] sm:$0xff] %v306
      %343 = vst [vmem:[#allocation2 + $0x48] sm:$0xff] %v201
      %344 = vst [vmem:[#allocation2 + $0x50] sm:$0xff] %v203
      %345 = vst [vmem:[#allocation2 + $0x58] sm:$0xff] %v311
      %346 = vst [vmem:[#allocation2 + $0x60] sm:$0xff] %v207
      %347 = vst [vmem:[#allocation2 + $0x68] sm:$0xff] %v209
      %348 = vst [vmem:[#allocation2 + $0x70] sm:$0xff] %v316
      %349 = vst [vmem:[#allocation2 + $0x78] sm:$0xff] %v213
      %350 = vst [vmem:[#allocation2 + $0x80] sm:$0xff] %v215
      %351 = vst [vmem:[#allocation2 + $0x88] sm:$0xff] %v321
      %352 = vst [vmem:[#allocation2 + $0x90] sm:$0xff] %v219
      %353 = vst [vmem:[#allocation2 + $0x98] sm:$0xff] %v221
      %354 = vst [vmem:[#allocation2 + $0xa0] sm:$0xff] %v326
      %355 = vst [vmem:[#allocation2 + $0xa8] sm:$0xff] %v225
      %356 = vst [vmem:[#allocation2 + $0xb0] sm:$0xff] %v227
      %357 = vst [vmem:[#allocation2 + $0xb8] sm:$0xff] %v331
      %v358 = vld [vmem:[#allocation5] sm:$0xff]
      %v359 = vld [vmem:[#allocation5 + $0x8] sm:$0xff]
      %v360 = vld [vmem:[#allocation5 + $0x10] sm:$0xff]
      %v361 = vld [vmem:[#allocation5 + $0x18] sm:$0xff]
      %v362 = vld [vmem:[#allocation5 + $0x20] sm:$0xff]
      %v363 = vld [vmem:[#allocation5 + $0x28] sm:$0xff]
      %v364 = vld [vmem:[#allocation5 + $0x30] sm:$0xff]
      %v365 = vld [vmem:[#allocation5 + $0x38] sm:$0xff]
      %v366 = vld [vmem:[#allocation5 + $0x40] sm:$0xff]
      %v367 = vld [vmem:[#allocation5 + $0x48] sm:$0xff]
      %v368 = vld [vmem:[#allocation5 + $0x50] sm:$0xff]
      %v369 = vld [vmem:[#allocation5 + $0x58] sm:$0xff]
      %v370 = vld [vmem:[#allocation5 + $0x60] sm:$0xff]
      %v371 = vld [vmem:[#allocation5 + $0x68] sm:$0xff]
      %v372 = vld [vmem:[#allocation5 + $0x70] sm:$0xff]
      %v373 = vld [vmem:[#allocation5 + $0x78] sm:$0xff]
      %v374 = vld [vmem:[#allocation5 + $0x80] sm:$0xff]
      %v375 = vld [vmem:[#allocation5 + $0x88] sm:$0xff]
      %v376 = vld [vmem:[#allocation5 + $0x90] sm:$0xff]
      %v377 = vld [vmem:[#allocation5 + $0x98] sm:$0xff]
      %v378 = vld [vmem:[#allocation5 + $0xa0] sm:$0xff]
      %v379 = vld [vmem:[#allocation5 + $0xa8] sm:$0xff]
      %v380 = vld [vmem:[#allocation5 + $0xb0] sm:$0xff]
      %v381 = vld [vmem:[#allocation5 + $0xb8] sm:$0xff]
      %v382 = vld [vmem:[#allocation5 + $0xc0] sm:$0xff]
      %v383 = vld [vmem:[#allocation5 + $0xc8] sm:$0xff]
      %v384 = vld [vmem:[#allocation5 + $0xd0] sm:$0xff]
      %v385 = vld [vmem:[#allocation5 + $0xd8] sm:$0xff]
      %v386 = vld [vmem:[#allocation5 + $0xe0] sm:$0xff]
      %v387 = vld [vmem:[#allocation5 + $0xe8] sm:$0xff]
      %v388 = vld [vmem:[#allocation5 + $0xf0] sm:$0xff]
      %v389 = vld [vmem:[#allocation5 + $0xf8] sm:$0xff]
      %v390 = vld [vmem:[#allocation5 + $0x100] sm:$0xff]
      %v391 = vld [vmem:[#allocation5 + $0x108] sm:$0xff]
      %v392 = vld [vmem:[#allocation5 + $0x110] sm:$0xff]
      %v393 = vld [vmem:[#allocation5 + $0x118] sm:$0xff]
      %v394 = vld [vmem:[#allocation5 + $0x120] sm:$0xff]
      %v395 = vld [vmem:[#allocation5 + $0x128] sm:$0xff]
      %v396 = vld [vmem:[#allocation5 + $0x130] sm:$0xff]
      %v397 = vld [vmem:[#allocation5 + $0x138] sm:$0xff]
      %v398 = vld [vmem:[#allocation5 + $0x140] sm:$0xff]
      %v399 = vld [vmem:[#allocation5 + $0x148] sm:$0xff]
      %v400 = vld [vmem:[#allocation5 + $0x150] sm:$0xff]
      %v401 = vld [vmem:[#allocation5 + $0x158] sm:$0xff]
      %v402 = vld [vmem:[#allocation5 + $0x160] sm:$0xff]
      %v403 = vld [vmem:[#allocation5 + $0x168] sm:$0xff]
      %v404 = vld [vmem:[#allocation5 + $0x170] sm:$0xff]
      %v405 = vld [vmem:[#allocation5 + $0x178] sm:$0xff]
      %v406 = vld [vmem:[%s6] sm:$0x1]
      %v407 = vld [vmem:[%s1] sm:$0xff]
      %v408 = vstv %s43
      %v409 = vsub.s32 %v407, %v408
      %v410 = vld [vmem:[#allocation3] sm:$0xff]
      %v412 = vlaneseq
      %v413 = vshrl.u32 %v412, 7
      %v414 = vsub.s32 0, %v413
      %v415 = vrot.slane %v406, %v414
      %v417 = vld [vmem:[#allocation2] sm:$0xff]
      %v418 = vld [vmem:[#allocation2 + $0x8] sm:$0xff]
      %v419 = vld [vmem:[#allocation2 + $0x10] sm:$0xff]
      %420 = vmatprep.subr.mxu0 %v404
      %421 = vmatpush1.msra.mxu0 %v403
      %422 = vmatprep.subr.mxu0 %v401
      %423 = vmatpush1.msra.mxu0 %v400
      %424 = vmatprep.subr.mxu0 %v398
      %425 = vmatpush1.msra.mxu0 %v397
      %426 = vmatprep.subr.mxu0 %v395
      %427 = vmatpush1.msra.mxu0 %v394
      %428 = vmatprep.subr.mxu0 %v392
      %429 = vmatpush1.msra.mxu0 %v391
      %430 = vmatprep.subr.mxu0 %v389
      %431 = vmatpush1.msra.mxu0 %v388
      %432 = vmatprep.subr.mxu0 %v386
      %433 = vmatpush1.msra.mxu0 %v385
      %434 = vmatprep.subr.mxu0 %v383
      %435 = vmatpush1.msra.mxu0 %v382
      %436 = vmatprep.subr.mxu0 %v380
      %437 = vmatpush1.msra.mxu0 %v379
      %438 = vmatprep.subr.mxu0 %v377
      %439 = vmatpush1.msra.mxu0 %v376
      %440 = vmatprep.subr.mxu0 %v374
      %441 = vmatpush1.msra.mxu0 %v373
      %442 = vmatprep.subr.mxu0 %v371
      %443 = vmatpush1.msra.mxu0 %v370
      %444 = vmatprep.subr.mxu0 %v368
      %445 = vmatpush1.msra.mxu0 %v367
      %446 = vmatprep.subr.mxu0 %v365
      %447 = vmatpush1.msra.mxu0 %v364
      %448 = vmatprep.subr.mxu0 %v362
      %449 = vmatpush1.msra.mxu0 %v361
      %450 = vmatprep.subr.mxu0 %v359
      %451 = vmatpush1.msra.mxu0 %v358
      %452 = vmatprep.subr.mxu0 0.0
      %453 = vmatpush2.msra.mxu0 0.0
      %454 = vmatprep.subr.mxu0 0.0
      %455 = vmatpush2.msra.mxu0 0.0
      %456 = vmatprep.subr.mxu0 0.0
      %457 = vmatpush2.msra.mxu0 0.0
      %458 = vmatprep.subr.mxu0 0.0
      %459 = vmatpush2.msra.mxu0 0.0
      %460 = vmatprep.subr.mxu0 0.0
      %461 = vmatpush2.msra.mxu0 0.0
      %462 = vmatprep.subr.mxu0 0.0
      %463 = vmatpush2.msra.mxu0 0.0
      %464 = vmatprep.subr.mxu0 0.0
      %465 = vmatpush2.msra.mxu0 0.0
      %466 = vmatprep.subr.mxu0 0.0
      %467 = vmatpush2.msra.mxu0 0.0
      %468 = vmatprep.subr.mxu0 0.0
      %469 = vmatpush2.msra.mxu0 0.0
      %470 = vmatprep.subr.mxu0 0.0
      %471 = vmatpush2.msra.mxu0 0.0
      %472 = vmatprep.subr.mxu0 0.0
      %473 = vmatpush2.msra.mxu0 0.0
      %474 = vmatprep.subr.mxu0 0.0
      %475 = vmatpush2.msra.mxu0 0.0
      %476 = vmatprep.subr.mxu0 0.0
      %477 = vmatpush2.msra.mxu0 0.0
      %478 = vmatprep.subr.mxu0 0.0
      %479 = vmatpush2.msra.mxu0 0.0
      %480 = vmatprep.subr.mxu0 0.0
      %481 = vmatpush2.msra.mxu0 0.0
      %482 = vmatprep.subr.mxu0 0.0
      %483 = vmatpush2.msra.mxu0 0.0
      %484 = vmatprep.mubr.f32.mxu0 0.0
      %485 = vmatmul.mubr.f32.gmra.mxu0 %v410
      %v486 = vpop.f32.mrf.mxu0
      %v487 = vadd.f32 0.0, %v486
      %v488 = vpop.f32.mrf.mxu0
      %v489 = vadd.f32 0.0, %v488
      %490 = vdwg.mxu0
      %491 = vmatprep.subr.mxu0 0.0
      %492 = vmatpush1.msra.mxu0 %v405
      %493 = vmatprep.subr.mxu0 0.0
      %494 = vmatpush1.msra.mxu0 %v402
      %495 = vmatprep.subr.mxu0 0.0
      %496 = vmatpush1.msra.mxu0 %v399
      %497 = vmatprep.subr.mxu0 0.0
      %498 = vmatpush1.msra.mxu0 %v396
      %499 = vmatprep.subr.mxu0 0.0
      %500 = vmatpush1.msra.mxu0 %v393
      %501 = vmatprep.subr.mxu0 0.0
      %502 = vmatpush1.msra.mxu0 %v390
      %503 = vmatprep.subr.mxu0 0.0
      %504 = vmatpush1.msra.mxu0 %v387
      %505 = vmatprep.subr.mxu0 0.0
      %506 = vmatpush1.msra.mxu0 %v384
      %507 = vmatprep.subr.mxu0 0.0
      %508 = vmatpush1.msra.mxu0 %v381
      %509 = vmatprep.subr.mxu0 0.0
      %510 = vmatpush1.msra.mxu0 %v378
      %511 = vmatprep.subr.mxu0 0.0
      %512 = vmatpush1.msra.mxu0 %v375
      %513 = vmatprep.subr.mxu0 0.0
      %514 = vmatpush1.msra.mxu0 %v372
      %515 = vmatprep.subr.mxu0 0.0
      %516 = vmatpush1.msra.mxu0 %v369
      %517 = vmatprep.subr.mxu0 0.0
      %518 = vmatpush1.msra.mxu0 %v366
      %519 = vmatprep.subr.mxu0 0.0
      %520 = vmatpush1.msra.mxu0 %v363
      %521 = vmatprep.subr.mxu0 0.0
      %522 = vmatpush1.msra.mxu0 %v360
      %523 = vmatprep.subr.mxu0 0.0
      %524 = vmatpush2.msra.mxu0 0.0
      %525 = vmatprep.subr.mxu0 0.0
      %526 = vmatpush2.msra.mxu0 0.0
      %527 = vmatprep.subr.mxu0 0.0
      %528 = vmatpush2.msra.mxu0 0.0
      %529 = vmatprep.subr.mxu0 0.0
      %530 = vmatpush2.msra.mxu0 0.0
      %531 = vmatprep.subr.mxu0 0.0
      %532 = vmatpush2.msra.mxu0 0.0
      %533 = vmatprep.subr.mxu0 0.0
      %534 = vmatpush2.msra.mxu0 0.0
      %535 = vmatprep.subr.mxu0 0.0
      %536 = vmatpush2.msra.mxu0 0.0
      %537 = vmatprep.subr.mxu0 0.0
      %538 = vmatpush2.msra.mxu0 0.0
      %539 = vmatprep.subr.mxu0 0.0
      %540 = vmatpush2.msra.mxu0 0.0
      %541 = vmatprep.subr.mxu0 0.0
      %542 = vmatpush2.msra.mxu0 0.0
      %543 = vmatprep.subr.mxu0 0.0
      %544 = vmatpush2.msra.mxu0 0.0
      %545 = vmatprep.subr.mxu0 0.0
      %546 = vmatpush2.msra.mxu0 0.0
      %547 = vmatprep.subr.mxu0 0.0
      %548 = vmatpush2.msra.mxu0 0.0
      %549 = vmatprep.subr.mxu0 0.0
      %550 = vmatpush2.msra.mxu0 0.0
      %551 = vmatprep.subr.mxu0 0.0
      %552 = vmatpush2.msra.mxu0 0.0
      %553 = vmatprep.subr.mxu0 0.0
      %554 = vmatpush2.msra.mxu0 0.0
      %555 = vmatprep.mubr.f32.mxu0 0.0
      %556 = vmatmul.mubr.f32.gmra.mxu0 %v410
      %v557 = vpop.f32.mrf.mxu0
      %v558 = vadd.f32 0.0, %v557
      %v559 = vpop.f32.mrf.mxu0
      %560 = vdwg.mxu0
      %v561 = vadd.f32 %v417, %v487
      %v562 = vmul.f32 %v561, 0.5
      %v563 = vtanh.pop %v562
      %v564 = vmul.f32 %v563, 0.5
      %v565 = vadd.f32 %v564, 0.5
      %v566 = vadd.f32 %v418, %v489
      %v567 = vmul.f32 %v566, 0.5
      %v568 = vtanh.pop %v567
      %v569 = vmul.f32 %v568, 0.5
      %v570 = vadd.f32 %v569, 0.5
      %v571 = vadd.f32 %v558, %v415
      %v572 = vmul.f32 %v565, %v571
      %v573 = vadd.f32 %v419, %v572
      %v574 = vtanh.pop %v573
      %v575 = vsub.f32 %v410, %v574
      %v576 = vmul.f32 %v570, %v575
      %v577 = vadd.f32 %v574, %v576
      %vm578 = vcmp.gt.s32.totalorder %v409, 0
      %v579 = vsel %vm578, 1, 0
      %580 = vset.pattern.permute.xlu0 0
      %581 = vperm.xlu0 %580, %v579
      %v582 = vpop.permute.xlu0 %581
      %vm583 = vcmp.eq.s32.totalorder %v582, 1
      %v584 = vsel %vm583, %v577, 0.0
      %585 = vst [vmem:[%s7] sm:$0xff] %v584
      %v586 = vsel %vm583, %v577, %v410
      %s587 = scalar_lea.vmem [#allocation2], 24
      %v588 = vld [vmem:[%s587] sm:$0xff]
      %v589 = vld [vmem:[%s587 + $0x8] sm:$0xff]
      %v590 = vld [vmem:[%s587 + $0x10] sm:$0xff]
      %591 = vmatprep.subr.mxu0 %v404
      %592 = vmatpush1.msra.mxu0 %v403
      %593 = vmatprep.subr.mxu0 %v401
      %594 = vmatpush1.msra.mxu0 %v400
      %595 = vmatprep.subr.mxu0 %v398
      %596 = vmatpush1.msra.mxu0 %v397
      %597 = vmatprep.subr.mxu0 %v395
      %598 = vmatpush1.msra.mxu0 %v394
      %599 = vmatprep.subr.mxu0 %v392
      %600 = vmatpush1.msra.mxu0 %v391
      %601 = vmatprep.subr.mxu0 %v389
      %602 = vmatpush1.msra.mxu0 %v388
      %603 = vmatprep.subr.mxu0 %v386
      %604 = vmatpush1.msra.mxu0 %v385
      %605 = vmatprep.subr.mxu0 %v383
      %606 = vmatpush1.msra.mxu0 %v382
      %607 = vmatprep.subr.mxu0 %v380
      %608 = vmatpush1.msra.mxu0 %v379
      %609 = vmatprep.subr.mxu0 %v377
      %610 = vmatpush1.msra.mxu0 %v376
      %611 = vmatprep.subr.mxu0 %v374
      %612 = vmatpush1.msra.mxu0 %v373
      %613 = vmatprep.subr.mxu0 %v371
      %614 = vmatpush1.msra.mxu0 %v370
      %615 = vmatprep.subr.mxu0 %v368
      %616 = vmatpush1.msra.mxu0 %v367
      %617 = vmatprep.subr.mxu0 %v365
      %618 = vmatpush1.msra.mxu0 %v364
      %619 = vmatprep.subr.mxu0 %v362
      %620 = vmatpush1.msra.mxu0 %v361
      %621 = vmatprep.subr.mxu0 %v359
      %622 = vmatpush1.msra.mxu0 %v358
      %623 = vmatprep.subr.mxu0 0.0
      %624 = vmatpush2.msra.mxu0 0.0
      %625 = vmatprep.subr.mxu0 0.0
      %626 = vmatpush2.msra.mxu0 0.0
      %627 = vmatprep.subr.mxu0 0.0
      %628 = vmatpush2.msra.mxu0 0.0
      %629 = vmatprep.subr.mxu0 0.0
      %630 = vmatpush2.msra.mxu0 0.0
      %631 = vmatprep.subr.mxu0 0.0
      %632 = vmatpush2.msra.mxu0 0.0
      %633 = vmatprep.subr.mxu0 0.0
      %634 = vmatpush2.msra.mxu0 0.0
      %635 = vmatprep.subr.mxu0 0.0
      %636 = vmatpush2.msra.mxu0 0.0
      %637 = vmatprep.subr.mxu0 0.0
      %638 = vmatpush2.msra.mxu0 0.0
      %639 = vmatprep.subr.mxu0 0.0
      %640 = vmatpush2.msra.mxu0 0.0
      %641 = vmatprep.subr.mxu0 0.0
      %642 = vmatpush2.msra.mxu0 0.0
      %643 = vmatprep.subr.mxu0 0.0
      %644 = vmatpush2.msra.mxu0 0.0
      %645 = vmatprep.subr.mxu0 0.0
      %646 = vmatpush2.msra.mxu0 0.0
      %647 = vmatprep.subr.mxu0 0.0
      %648 = vmatpush2.msra.mxu0 0.0
      %649 = vmatprep.subr.mxu0 0.0
      %650 = vmatpush2.msra.mxu0 0.0
      %651 = vmatprep.subr.mxu0 0.0
      %652 = vmatpush2.msra.mxu0 0.0
      %653 = vmatprep.subr.mxu0 0.0
      %654 = vmatpush2.msra.mxu0 0.0
      %655 = vmatprep.mubr.f32.mxu0 0.0
      %656 = vmatmul.mubr.f32.gmra.mxu0 %v586
      %v657 = vpop.f32.mrf.mxu0
      %v658 = vadd.f32 0.0, %v657
      %v659 = vpop.f32.mrf.mxu0
      %v660 = vadd.f32 0.0, %v659
      %661 = vdwg.mxu0
      %662 = vmatprep.subr.mxu0 0.0
      %663 = vmatpush1.msra.mxu0 %v405
      %664 = vmatprep.subr.mxu0 0.0
      %665 = vmatpush1.msra.mxu0 %v402
      %666 = vmatprep.subr.mxu0 0.0
      %667 = vmatpush1.msra.mxu0 %v399
      %668 = vmatprep.subr.mxu0 0.0
      %669 = vmatpush1.msra.mxu0 %v396
      %670 = vmatprep.subr.mxu0 0.0
      %671 = vmatpush1.msra.mxu0 %v393
      %672 = vmatprep.subr.mxu0 0.0
      %673 = vmatpush1.msra.mxu0 %v390
      %674 = vmatprep.subr.mxu0 0.0
      %675 = vmatpush1.msra.mxu0 %v387
      %676 = vmatprep.subr.mxu0 0.0
      %677 = vmatpush1.msra.mxu0 %v384
      %678 = vmatprep.subr.mxu0 0.0
      %679 = vmatpush1.msra.mxu0 %v381
      %680 = vmatprep.subr.mxu0 0.0
      %681 = vmatpush1.msra.mxu0 %v378
      %682 = vmatprep.subr.mxu0 0.0
      %683 = vmatpush1.msra.mxu0 %v375
      %684 = vmatprep.subr.mxu0 0.0
      %685 = vmatpush1.msra.mxu0 %v372
      %686 = vmatprep.subr.mxu0 0.0
      %687 = vmatpush1.msra.mxu0 %v369
      %688 = vmatprep.subr.mxu0 0.0
      %689 = vmatpush1.msra.mxu0 %v366
      %690 = vmatprep.subr.mxu0 0.0
      %691 = vmatpush1.msra.mxu0 %v363
      %692 = vmatprep.subr.mxu0 0.0
      %693 = vmatpush1.msra.mxu0 %v360
      %694 = vmatprep.subr.mxu0 0.0
      %695 = vmatpush2.msra.mxu0 0.0
      %696 = vmatprep.subr.mxu0 0.0
      %697 = vmatpush2.msra.mxu0 0.0
      %698 = vmatprep.subr.mxu0 0.0
      %699 = vmatpush2.msra.mxu0 0.0
      %700 = vmatprep.subr.mxu0 0.0
      %701 = vmatpush2.msra.mxu0 0.0
      %702 = vmatprep.subr.mxu0 0.0
      %703 = vmatpush2.msra.mxu0 0.0
      %704 = vmatprep.subr.mxu0 0.0
      %705 = vmatpush2.msra.mxu0 0.0
      %706 = vmatprep.subr.mxu0 0.0
      %707 = vmatpush2.msra.mxu0 0.0
      %708 = vmatprep.subr.mxu0 0.0
      %709 = vmatpush2.msra.mxu0 0.0
      %710 = vmatprep.subr.mxu0 0.0
      %711 = vmatpush2.msra.mxu0 0.0
      %712 = vmatprep.subr.mxu0 0.0
      %713 = vmatpush2.msra.mxu0 0.0
      %714 = vmatprep.subr.mxu0 0.0
      %715 = vmatpush2.msra.mxu0 0.0
      %716 = vmatprep.subr.mxu0 0.0
      %717 = vmatpush2.msra.mxu0 0.0
      %718 = vmatprep.subr.mxu0 0.0
      %719 = vmatpush2.msra.mxu0 0.0
      %720 = vmatprep.subr.mxu0 0.0
      %721 = vmatpush2.msra.mxu0 0.0
      %722 = vmatprep.subr.mxu0 0.0
      %723 = vmatpush2.msra.mxu0 0.0
      %724 = vmatprep.subr.mxu0 0.0
      %725 = vmatpush2.msra.mxu0 0.0
      %726 = vmatprep.mubr.f32.mxu0 0.0
      %727 = vmatmul.mubr.f32.gmra.mxu0 %v586
      %v728 = vpop.f32.mrf.mxu0
      %v729 = vadd.f32 0.0, %v728
      %v730 = vpop.f32.mrf.mxu0
      %731 = vdwg.mxu0
      %v732 = vadd.f32 %v588, %v658
      %v733 = vmul.f32 %v732, 0.5
      %v734 = vtanh.pop %v733
      %v735 = vmul.f32 %v734, 0.5
      %v736 = vadd.f32 %v735, 0.5
      %v737 = vadd.f32 %v589, %v660
      %v738 = vmul.f32 %v737, 0.5
      %v739 = vtanh.pop %v738
      %v740 = vmul.f32 %v739, 0.5
      %v741 = vadd.f32 %v740, 0.5
      %v742 = vadd.f32 %v729, %v415
      %v743 = vmul.f32 %v736, %v742
      %v744 = vadd.f32 %v590, %v743
      %v745 = vtanh.pop %v744
      %v746 = vsub.f32 %v586, %v745
      %v747 = vmul.f32 %v741, %v746
      %v748 = vadd.f32 %v745, %v747
      %vm749 = vcmp.gt.s32.totalorder %v409, 1
      %v750 = vsel %vm749, 1, 0
      %751 = vset.pattern.permute.xlu0 0
      %752 = vperm.xlu0 %751, %v750
      %v753 = vpop.permute.xlu0 %752
      %vm754 = vcmp.eq.s32.totalorder %v753, 1
      %v755 = vsel %vm754, %v748, 0.0
      %s756 = scalar_lea.vmem %s7, 8
      %757 = vst [vmem:[%s756] sm:$0xff] %v755
      %v758 = vsel %vm754, %v748, %v586
      %s759 = scalar_lea.vmem [#allocation2], 48
      %v760 = vld [vmem:[%s759] sm:$0xff]
      %v761 = vld [vmem:[%s759 + $0x8] sm:$0xff]
      %v762 = vld [vmem:[%s759 + $0x10] sm:$0xff]
      %763 = vmatprep.subr.mxu0 %v404
      %764 = vmatpush1.msra.mxu0 %v403
      %765 = vmatprep.subr.mxu0 %v401
      %766 = vmatpush1.msra.mxu0 %v400
      %767 = vmatprep.subr.mxu0 %v398
      %768 = vmatpush1.msra.mxu0 %v397
      %769 = vmatprep.subr.mxu0 %v395
      %770 = vmatpush1.msra.mxu0 %v394
      %771 = vmatprep.subr.mxu0 %v392
      %772 = vmatpush1.msra.mxu0 %v391
      %773 = vmatprep.subr.mxu0 %v389
      %774 = vmatpush1.msra.mxu0 %v388
      %775 = vmatprep.subr.mxu0 %v386
      %776 = vmatpush1.msra.mxu0 %v385
      %777 = vmatprep.subr.mxu0 %v383
      %778 = vmatpush1.msra.mxu0 %v382
      %779 = vmatprep.subr.mxu0 %v380
      %780 = vmatpush1.msra.mxu0 %v379
      %781 = vmatprep.subr.mxu0 %v377
      %782 = vmatpush1.msra.mxu0 %v376
      %783 = vmatprep.subr.mxu0 %v374
      %784 = vmatpush1.msra.mxu0 %v373
      %785 = vmatprep.subr.mxu0 %v371
      %786 = vmatpush1.msra.mxu0 %v370
      %787 = vmatprep.subr.mxu0 %v368
      %788 = vmatpush1.msra.mxu0 %v367
      %789 = vmatprep.subr.mxu0 %v365
      %790 = vmatpush1.msra.mxu0 %v364
      %791 = vmatprep.subr.mxu0 %v362
      %792 = vmatpush1.msra.mxu0 %v361
      %793 = vmatprep.subr.mxu0 %v359
      %794 = vmatpush1.msra.mxu0 %v358
      %795 = vmatprep.subr.mxu0 0.0
      %796 = vmatpush2.msra.mxu0 0.0
      %797 = vmatprep.subr.mxu0 0.0
      %798 = vmatpush2.msra.mxu0 0.0
      %799 = vmatprep.subr.mxu0 0.0
      %800 = vmatpush2.msra.mxu0 0.0
      %801 = vmatprep.subr.mxu0 0.0
      %802 = vmatpush2.msra.mxu0 0.0
      %803 = vmatprep.subr.mxu0 0.0
      %804 = vmatpush2.msra.mxu0 0.0
      %805 = vmatprep.subr.mxu0 0.0
      %806 = vmatpush2.msra.mxu0 0.0
      %807 = vmatprep.subr.mxu0 0.0
      %808 = vmatpush2.msra.mxu0 0.0
      %809 = vmatprep.subr.mxu0 0.0
      %810 = vmatpush2.msra.mxu0 0.0
      %811 = vmatprep.subr.mxu0 0.0
      %812 = vmatpush2.msra.mxu0 0.0
      %813 = vmatprep.subr.mxu0 0.0
      %814 = vmatpush2.msra.mxu0 0.0
      %815 = vmatprep.subr.mxu0 0.0
      %816 = vmatpush2.msra.mxu0 0.0
      %817 = vmatprep.subr.mxu0 0.0
      %818 = vmatpush2.msra.mxu0 0.0
      %819 = vmatprep.subr.mxu0 0.0
      %820 = vmatpush2.msra.mxu0 0.0
      %821 = vmatprep.subr.mxu0 0.0
      %822 = vmatpush2.msra.mxu0 0.0
      %823 = vmatprep.subr.mxu0 0.0
      %824 = vmatpush2.msra.mxu0 0.0
      %825 = vmatprep.subr.mxu0 0.0
      %826 = vmatpush2.msra.mxu0 0.0
      %827 = vmatprep.mubr.f32.mxu0 0.0
      %828 = vmatmul.mubr.f32.gmra.mxu0 %v758
      %v829 = vpop.f32.mrf.mxu0
      %v830 = vadd.f32 0.0, %v829
      %v831 = vpop.f32.mrf.mxu0
      %v832 = vadd.f32 0.0, %v831
      %833 = vdwg.mxu0
      %834 = vmatprep.subr.mxu0 0.0
      %835 = vmatpush1.msra.mxu0 %v405
      %836 = vmatprep.subr.mxu0 0.0
      %837 = vmatpush1.msra.mxu0 %v402
      %838 = vmatprep.subr.mxu0 0.0
      %839 = vmatpush1.msra.mxu0 %v399
      %840 = vmatprep.subr.mxu0 0.0
      %841 = vmatpush1.msra.mxu0 %v396
      %842 = vmatprep.subr.mxu0 0.0
      %843 = vmatpush1.msra.mxu0 %v393
      %844 = vmatprep.subr.mxu0 0.0
      %845 = vmatpush1.msra.mxu0 %v390
      %846 = vmatprep.subr.mxu0 0.0
      %847 = vmatpush1.msra.mxu0 %v387
      %848 = vmatprep.subr.mxu0 0.0
      %849 = vmatpush1.msra.mxu0 %v384
      %850 = vmatprep.subr.mxu0 0.0
      %851 = vmatpush1.msra.mxu0 %v381
      %852 = vmatprep.subr.mxu0 0.0
      %853 = vmatpush1.msra.mxu0 %v378
      %854 = vmatprep.subr.mxu0 0.0
      %855 = vmatpush1.msra.mxu0 %v375
      %856 = vmatprep.subr.mxu0 0.0
      %857 = vmatpush1.msra.mxu0 %v372
      %858 = vmatprep.subr.mxu0 0.0
      %859 = vmatpush1.msra.mxu0 %v369
      %860 = vmatprep.subr.mxu0 0.0
      %861 = vmatpush1.msra.mxu0 %v366
      %862 = vmatprep.subr.mxu0 0.0
      %863 = vmatpush1.msra.mxu0 %v363
      %864 = vmatprep.subr.mxu0 0.0
      %865 = vmatpush1.msra.mxu0 %v360
      %866 = vmatprep.subr.mxu0 0.0
      %867 = vmatpush2.msra.mxu0 0.0
      %868 = vmatprep.subr.mxu0 0.0
      %869 = vmatpush2.msra.mxu0 0.0
      %870 = vmatprep.subr.mxu0 0.0
      %871 = vmatpush2.msra.mxu0 0.0
      %872 = vmatprep.subr.mxu0 0.0
      %873 = vmatpush2.msra.mxu0 0.0
      %874 = vmatprep.subr.mxu0 0.0
      %875 = vmatpush2.msra.mxu0 0.0
      %876 = vmatprep.subr.mxu0 0.0
      %877 = vmatpush2.msra.mxu0 0.0
      %878 = vmatprep.subr.mxu0 0.0
      %879 = vmatpush2.msra.mxu0 0.0
      %880 = vmatprep.subr.mxu0 0.0
      %881 = vmatpush2.msra.mxu0 0.0
      %882 = vmatprep.subr.mxu0 0.0
      %883 = vmatpush2.msra.mxu0 0.0
      %884 = vmatprep.subr.mxu0 0.0
      %885 = vmatpush2.msra.mxu0 0.0
      %886 = vmatprep.subr.mxu0 0.0
      %887 = vmatpush2.msra.mxu0 0.0
      %888 = vmatprep.subr.mxu0 0.0
      %889 = vmatpush2.msra.mxu0 0.0
      %890 = vmatprep.subr.mxu0 0.0
      %891 = vmatpush2.msra.mxu0 0.0
      %892 = vmatprep.subr.mxu0 0.0
      %893 = vmatpush2.msra.mxu0 0.0
      %894 = vmatprep.subr.mxu0 0.0
      %895 = vmatpush2.msra.mxu0 0.0
      %896 = vmatprep.subr.mxu0 0.0
      %897 = vmatpush2.msra.mxu0 0.0
      %898 = vmatprep.mubr.f32.mxu0 0.0
      %899 = vmatmul.mubr.f32.gmra.mxu0 %v758
      %v900 = vpop.f32.mrf.mxu0
      %v901 = vadd.f32 0.0, %v900
      %v902 = vpop.f32.mrf.mxu0
      %903 = vdwg.mxu0
      %v904 = vadd.f32 %v760, %v830
      %v905 = vmul.f32 %v904, 0.5
      %v906 = vtanh.pop %v905
      %v907 = vmul.f32 %v906, 0.5
      %v908 = vadd.f32 %v907, 0.5
      %v909 = vadd.f32 %v761, %v832
      %v910 = vmul.f32 %v909, 0.5
      %v911 = vtanh.pop %v910
      %v912 = vmul.f32 %v911, 0.5
      %v913 = vadd.f32 %v912, 0.5
      %v914 = vadd.f32 %v901, %v415
      %v915 = vmul.f32 %v908, %v914
      %v916 = vadd.f32 %v762, %v915
      %v917 = vtanh.pop %v916
      %v918 = vsub.f32 %v758, %v917
      %v919 = vmul.f32 %v913, %v918
      %v920 = vadd.f32 %v917, %v919
      %vm921 = vcmp.gt.s32.totalorder %v409, 2
      %v922 = vsel %vm921, 1, 0
      %923 = vset.pattern.permute.xlu0 0
      %924 = vperm.xlu0 %923, %v922
      %v925 = vpop.permute.xlu0 %924
      %vm926 = vcmp.eq.s32.totalorder %v925, 1
      %v927 = vsel %vm926, %v920, 0.0
      %s928 = scalar_lea.vmem %s7, 16
      %929 = vst [vmem:[%s928] sm:$0xff] %v927
      %v930 = vsel %vm926, %v920, %v758
      %s931 = scalar_lea.vmem [#allocation2], 72
      %v932 = vld [vmem:[%s931] sm:$0xff]
      %v933 = vld [vmem:[%s931 + $0x8] sm:$0xff]
      %v934 = vld [vmem:[%s931 + $0x10] sm:$0xff]
      %935 = vmatprep.subr.mxu0 %v404
      %936 = vmatpush1.msra.mxu0 %v403
      %937 = vmatprep.subr.mxu0 %v401
      %938 = vmatpush1.msra.mxu0 %v400
      %939 = vmatprep.subr.mxu0 %v398
      %940 = vmatpush1.msra.mxu0 %v397
      %941 = vmatprep.subr.mxu0 %v395
      %942 = vmatpush1.msra.mxu0 %v394
      %943 = vmatprep.subr.mxu0 %v392
      %944 = vmatpush1.msra.mxu0 %v391
      %945 = vmatprep.subr.mxu0 %v389
      %946 = vmatpush1.msra.mxu0 %v388
      %947 = vmatprep.subr.mxu0 %v386
      %948 = vmatpush1.msra.mxu0 %v385
      %949 = vmatprep.subr.mxu0 %v383
      %950 = vmatpush1.msra.mxu0 %v382
      %951 = vmatprep.subr.mxu0 %v380
      %952 = vmatpush1.msra.mxu0 %v379
      %953 = vmatprep.subr.mxu0 %v377
      %954 = vmatpush1.msra.mxu0 %v376
      %955 = vmatprep.subr.mxu0 %v374
      %956 = vmatpush1.msra.mxu0 %v373
      %957 = vmatprep.subr.mxu0 %v371
      %958 = vmatpush1.msra.mxu0 %v370
      %959 = vmatprep.subr.mxu0 %v368
      %960 = vmatpush1.msra.mxu0 %v367
      %961 = vmatprep.subr.mxu0 %v365
      %962 = vmatpush1.msra.mxu0 %v364
      %963 = vmatprep.subr.mxu0 %v362
      %964 = vmatpush1.msra.mxu0 %v361
      %965 = vmatprep.subr.mxu0 %v359
      %966 = vmatpush1.msra.mxu0 %v358
      %967 = vmatprep.subr.mxu0 0.0
      %968 = vmatpush2.msra.mxu0 0.0
      %969 = vmatprep.subr.mxu0 0.0
      %970 = vmatpush2.msra.mxu0 0.0
      %971 = vmatprep.subr.mxu0 0.0
      %972 = vmatpush2.msra.mxu0 0.0
      %973 = vmatprep.subr.mxu0 0.0
      %974 = vmatpush2.msra.mxu0 0.0
      %975 = vmatprep.subr.mxu0 0.0
      %976 = vmatpush2.msra.mxu0 0.0
      %977 = vmatprep.subr.mxu0 0.0
      %978 = vmatpush2.msra.mxu0 0.0
      %979 = vmatprep.subr.mxu0 0.0
      %980 = vmatpush2.msra.mxu0 0.0
      %981 = vmatprep.subr.mxu0 0.0
      %982 = vmatpush2.msra.mxu0 0.0
      %983 = vmatprep.subr.mxu0 0.0
      %984 = vmatpush2.msra.mxu0 0.0
      %985 = vmatprep.subr.mxu0 0.0
      %986 = vmatpush2.msra.mxu0 0.0
      %987 = vmatprep.subr.mxu0 0.0
      %988 = vmatpush2.msra.mxu0 0.0
      %989 = vmatprep.subr.mxu0 0.0
      %990 = vmatpush2.msra.mxu0 0.0
      %991 = vmatprep.subr.mxu0 0.0
      %992 = vmatpush2.msra.mxu0 0.0
      %993 = vmatprep.subr.mxu0 0.0
      %994 = vmatpush2.msra.mxu0 0.0
      %995 = vmatprep.subr.mxu0 0.0
      %996 = vmatpush2.msra.mxu0 0.0
      %997 = vmatprep.subr.mxu0 0.0
      %998 = vmatpush2.msra.mxu0 0.0
      %999 = vmatprep.mubr.f32.mxu0 0.0
      %1000 = vmatmul.mubr.f32.gmra.mxu0 %v930
      %v1001 = vpop.f32.mrf.mxu0
      %v1002 = vadd.f32 0.0, %v1001
      %v1003 = vpop.f32.mrf.mxu0
      %v1004 = vadd.f32 0.0, %v1003
      %1005 = vdwg.mxu0
      %1006 = vmatprep.subr.mxu0 0.0
      %1007 = vmatpush1.msra.mxu0 %v405
      %1008 = vmatprep.subr.mxu0 0.0
      %1009 = vmatpush1.msra.mxu0 %v402
      %1010 = vmatprep.subr.mxu0 0.0
      %1011 = vmatpush1.msra.mxu0 %v399
      %1012 = vmatprep.subr.mxu0 0.0
      %1013 = vmatpush1.msra.mxu0 %v396
      %1014 = vmatprep.subr.mxu0 0.0
      %1015 = vmatpush1.msra.mxu0 %v393
      %1016 = vmatprep.subr.mxu0 0.0
      %1017 = vmatpush1.msra.mxu0 %v390
      %1018 = vmatprep.subr.mxu0 0.0
      %1019 = vmatpush1.msra.mxu0 %v387
      %1020 = vmatprep.subr.mxu0 0.0
      %1021 = vmatpush1.msra.mxu0 %v384
      %1022 = vmatprep.subr.mxu0 0.0
      %1023 = vmatpush1.msra.mxu0 %v381
      %1024 = vmatprep.subr.mxu0 0.0
      %1025 = vmatpush1.msra.mxu0 %v378
      %1026 = vmatprep.subr.mxu0 0.0
      %1027 = vmatpush1.msra.mxu0 %v375
      %1028 = vmatprep.subr.mxu0 0.0
      %1029 = vmatpush1.msra.mxu0 %v372
      %1030 = vmatprep.subr.mxu0 0.0
      %1031 = vmatpush1.msra.mxu0 %v369
      %1032 = vmatprep.subr.mxu0 0.0
      %1033 = vmatpush1.msra.mxu0 %v366
      %1034 = vmatprep.subr.mxu0 0.0
      %1035 = vmatpush1.msra.mxu0 %v363
      %1036 = vmatprep.subr.mxu0 0.0
      %1037 = vmatpush1.msra.mxu0 %v360
      %1038 = vmatprep.subr.mxu0 0.0
      %1039 = vmatpush2.msra.mxu0 0.0
      %1040 = vmatprep.subr.mxu0 0.0
      %1041 = vmatpush2.msra.mxu0 0.0
      %1042 = vmatprep.subr.mxu0 0.0
      %1043 = vmatpush2.msra.mxu0 0.0
      %1044 = vmatprep.subr.mxu0 0.0
      %1045 = vmatpush2.msra.mxu0 0.0
      %1046 = vmatprep.subr.mxu0 0.0
      %1047 = vmatpush2.msra.mxu0 0.0
      %1048 = vmatprep.subr.mxu0 0.0
      %1049 = vmatpush2.msra.mxu0 0.0
      %1050 = vmatprep.subr.mxu0 0.0
      %1051 = vmatpush2.msra.mxu0 0.0
      %1052 = vmatprep.subr.mxu0 0.0
      %1053 = vmatpush2.msra.mxu0 0.0
      %1054 = vmatprep.subr.mxu0 0.0
      %1055 = vmatpush2.msra.mxu0 0.0
      %1056 = vmatprep.subr.mxu0 0.0
      %1057 = vmatpush2.msra.mxu0 0.0
      %1058 = vmatprep.subr.mxu0 0.0
      %1059 = vmatpush2.msra.mxu0 0.0
      %1060 = vmatprep.subr.mxu0 0.0
      %1061 = vmatpush2.msra.mxu0 0.0
      %1062 = vmatprep.subr.mxu0 0.0
      %1063 = vmatpush2.msra.mxu0 0.0
      %1064 = vmatprep.subr.mxu0 0.0
      %1065 = vmatpush2.msra.mxu0 0.0
      %1066 = vmatprep.subr.mxu0 0.0
      %1067 = vmatpush2.msra.mxu0 0.0
      %1068 = vmatprep.subr.mxu0 0.0
      %1069 = vmatpush2.msra.mxu0 0.0
      %1070 = vmatprep.mubr.f32.mxu0 0.0
      %1071 = vmatmul.mubr.f32.gmra.mxu0 %v930
      %v1072 = vpop.f32.mrf.mxu0
      %v1073 = vadd.f32 0.0, %v1072
      %v1074 = vpop.f32.mrf.mxu0
      %1075 = vdwg.mxu0
      %v1076 = vadd.f32 %v932, %v1002
      %v1077 = vmul.f32 %v1076, 0.5
      %v1078 = vtanh.pop %v1077
      %v1079 = vmul.f32 %v1078, 0.5
      %v1080 = vadd.f32 %v1079, 0.5
      %v1081 = vadd.f32 %v933, %v1004
      %v1082 = vmul.f32 %v1081, 0.5
      %v1083 = vtanh.pop %v1082
      %v1084 = vmul.f32 %v1083, 0.5
      %v1085 = vadd.f32 %v1084, 0.5
      %v1086 = vadd.f32 %v1073, %v415
      %v1087 = vmul.f32 %v1080, %v1086
      %v1088 = vadd.f32 %v934, %v1087
      %v1089 = vtanh.pop %v1088
      %v1090 = vsub.f32 %v930, %v1089
      %v1091 = vmul.f32 %v1085, %v1090
      %v1092 = vadd.f32 %v1089, %v1091
      %vm1093 = vcmp.gt.s32.totalorder %v409, 3
      %v1094 = vsel %vm1093, 1, 0
      %1095 = vset.pattern.permute.xlu0 0
      %1096 = vperm.xlu0 %1095, %v1094
      %v1097 = vpop.permute.xlu0 %1096
      %vm1098 = vcmp.eq.s32.totalorder %v1097, 1
      %v1099 = vsel %vm1098, %v1092, 0.0
      %s1100 = scalar_lea.vmem %s7, 24
      %1101 = vst [vmem:[%s1100] sm:$0xff] %v1099
      %v1102 = vsel %vm1098, %v1092, %v930
      %s1103 = scalar_lea.vmem [#allocation2], 96
      %v1104 = vld [vmem:[%s1103] sm:$0xff]
      %v1105 = vld [vmem:[%s1103 + $0x8] sm:$0xff]
      %v1106 = vld [vmem:[%s1103 + $0x10] sm:$0xff]
      %1107 = vmatprep.subr.mxu0 %v404
      %1108 = vmatpush1.msra.mxu0 %v403
      %1109 = vmatprep.subr.mxu0 %v401
      %1110 = vmatpush1.msra.mxu0 %v400
      %1111 = vmatprep.subr.mxu0 %v398
      %1112 = vmatpush1.msra.mxu0 %v397
      %1113 = vmatprep.subr.mxu0 %v395
      %1114 = vmatpush1.msra.mxu0 %v394
      %1115 = vmatprep.subr.mxu0 %v392
      %1116 = vmatpush1.msra.mxu0 %v391
      %1117 = vmatprep.subr.mxu0 %v389
      %1118 = vmatpush1.msra.mxu0 %v388
      %1119 = vmatprep.subr.mxu0 %v386
      %1120 = vmatpush1.msra.mxu0 %v385
      %1121 = vmatprep.subr.mxu0 %v383
      %1122 = vmatpush1.msra.mxu0 %v382
      %1123 = vmatprep.subr.mxu0 %v380
      %1124 = vmatpush1.msra.mxu0 %v379
      %1125 = vmatprep.subr.mxu0 %v377
      %1126 = vmatpush1.msra.mxu0 %v376
      %1127 = vmatprep.subr.mxu0 %v374
      %1128 = vmatpush1.msra.mxu0 %v373
      %1129 = vmatprep.subr.mxu0 %v371
      %1130 = vmatpush1.msra.mxu0 %v370
      %1131 = vmatprep.subr.mxu0 %v368
      %1132 = vmatpush1.msra.mxu0 %v367
      %1133 = vmatprep.subr.mxu0 %v365
      %1134 = vmatpush1.msra.mxu0 %v364
      %1135 = vmatprep.subr.mxu0 %v362
      %1136 = vmatpush1.msra.mxu0 %v361
      %1137 = vmatprep.subr.mxu0 %v359
      %1138 = vmatpush1.msra.mxu0 %v358
      %1139 = vmatprep.subr.mxu0 0.0
      %1140 = vmatpush2.msra.mxu0 0.0
      %1141 = vmatprep.subr.mxu0 0.0
      %1142 = vmatpush2.msra.mxu0 0.0
      %1143 = vmatprep.subr.mxu0 0.0
      %1144 = vmatpush2.msra.mxu0 0.0
      %1145 = vmatprep.subr.mxu0 0.0
      %1146 = vmatpush2.msra.mxu0 0.0
      %1147 = vmatprep.subr.mxu0 0.0
      %1148 = vmatpush2.msra.mxu0 0.0
      %1149 = vmatprep.subr.mxu0 0.0
      %1150 = vmatpush2.msra.mxu0 0.0
      %1151 = vmatprep.subr.mxu0 0.0
      %1152 = vmatpush2.msra.mxu0 0.0
      %1153 = vmatprep.subr.mxu0 0.0
      %1154 = vmatpush2.msra.mxu0 0.0
      %1155 = vmatprep.subr.mxu0 0.0
      %1156 = vmatpush2.msra.mxu0 0.0
      %1157 = vmatprep.subr.mxu0 0.0
      %1158 = vmatpush2.msra.mxu0 0.0
      %1159 = vmatprep.subr.mxu0 0.0
      %1160 = vmatpush2.msra.mxu0 0.0
      %1161 = vmatprep.subr.mxu0 0.0
      %1162 = vmatpush2.msra.mxu0 0.0
      %1163 = vmatprep.subr.mxu0 0.0
      %1164 = vmatpush2.msra.mxu0 0.0
      %1165 = vmatprep.subr.mxu0 0.0
      %1166 = vmatpush2.msra.mxu0 0.0
      %1167 = vmatprep.subr.mxu0 0.0
      %1168 = vmatpush2.msra.mxu0 0.0
      %1169 = vmatprep.subr.mxu0 0.0
      %1170 = vmatpush2.msra.mxu0 0.0
      %1171 = vmatprep.mubr.f32.mxu0 0.0
      %1172 = vmatmul.mubr.f32.gmra.mxu0 %v1102
      %v1173 = vpop.f32.mrf.mxu0
      %v1174 = vadd.f32 0.0, %v1173
      %v1175 = vpop.f32.mrf.mxu0
      %v1176 = vadd.f32 0.0, %v1175
      %1177 = vdwg.mxu0
      %1178 = vmatprep.subr.mxu0 0.0
      %1179 = vmatpush1.msra.mxu0 %v405
      %1180 = vmatprep.subr.mxu0 0.0
      %1181 = vmatpush1.msra.mxu0 %v402
      %1182 = vmatprep.subr.mxu0 0.0
      %1183 = vmatpush1.msra.mxu0 %v399
      %1184 = vmatprep.subr.mxu0 0.0
      %1185 = vmatpush1.msra.mxu0 %v396
      %1186 = vmatprep.subr.mxu0 0.0
      %1187 = vmatpush1.msra.mxu0 %v393
      %1188 = vmatprep.subr.mxu0 0.0
      %1189 = vmatpush1.msra.mxu0 %v390
      %1190 = vmatprep.subr.mxu0 0.0
      %1191 = vmatpush1.msra.mxu0 %v387
      %1192 = vmatprep.subr.mxu0 0.0
      %1193 = vmatpush1.msra.mxu0 %v384
      %1194 = vmatprep.subr.mxu0 0.0
      %1195 = vmatpush1.msra.mxu0 %v381
      %1196 = vmatprep.subr.mxu0 0.0
      %1197 = vmatpush1.msra.mxu0 %v378
      %1198 = vmatprep.subr.mxu0 0.0
      %1199 = vmatpush1.msra.mxu0 %v375
      %1200 = vmatprep.subr.mxu0 0.0
      %1201 = vmatpush1.msra.mxu0 %v372
      %1202 = vmatprep.subr.mxu0 0.0
      %1203 = vmatpush1.msra.mxu0 %v369
      %1204 = vmatprep.subr.mxu0 0.0
      %1205 = vmatpush1.msra.mxu0 %v366
      %1206 = vmatprep.subr.mxu0 0.0
      %1207 = vmatpush1.msra.mxu0 %v363
      %1208 = vmatprep.subr.mxu0 0.0
      %1209 = vmatpush1.msra.mxu0 %v360
      %1210 = vmatprep.subr.mxu0 0.0
      %1211 = vmatpush2.msra.mxu0 0.0
      %1212 = vmatprep.subr.mxu0 0.0
      %1213 = vmatpush2.msra.mxu0 0.0
      %1214 = vmatprep.subr.mxu0 0.0
      %1215 = vmatpush2.msra.mxu0 0.0
      %1216 = vmatprep.subr.mxu0 0.0
      %1217 = vmatpush2.msra.mxu0 0.0
      %1218 = vmatprep.subr.mxu0 0.0
      %1219 = vmatpush2.msra.mxu0 0.0
      %1220 = vmatprep.subr.mxu0 0.0
      %1221 = vmatpush2.msra.mxu0 0.0
      %1222 = vmatprep.subr.mxu0 0.0
      %1223 = vmatpush2.msra.mxu0 0.0
      %1224 = vmatprep.subr.mxu0 0.0
      %1225 = vmatpush2.msra.mxu0 0.0
      %1226 = vmatprep.subr.mxu0 0.0
      %1227 = vmatpush2.msra.mxu0 0.0
      %1228 = vmatprep.subr.mxu0 0.0
      %1229 = vmatpush2.msra.mxu0 0.0
      %1230 = vmatprep.subr.mxu0 0.0
      %1231 = vmatpush2.msra.mxu0 0.0
      %1232 = vmatprep.subr.mxu0 0.0
      %1233 = vmatpush2.msra.mxu0 0.0
      %1234 = vmatprep.subr.mxu0 0.0
      %1235 = vmatpush2.msra.mxu0 0.0
      %1236 = vmatprep.subr.mxu0 0.0
      %1237 = vmatpush2.msra.mxu0 0.0
      %1238 = vmatprep.subr.mxu0 0.0
      %1239 = vmatpush2.msra.mxu0 0.0
      %1240 = vmatprep.subr.mxu0 0.0
      %1241 = vmatpush2.msra.mxu0 0.0
      %1242 = vmatprep.mubr.f32.mxu0 0.0
      %1243 = vmatmul.mubr.f32.gmra.mxu0 %v1102
      %v1244 = vpop.f32.mrf.mxu0
      %v1245 = vadd.f32 0.0, %v1244
      %v1246 = vpop.f32.mrf.mxu0
      %1247 = vdwg.mxu0
      %v1248 = vadd.f32 %v1104, %v1174
      %v1249 = vmul.f32 %v1248, 0.5
      %v1250 = vtanh.pop %v1249
      %v1251 = vmul.f32 %v1250, 0.5
      %v1252 = vadd.f32 %v1251, 0.5
      %v1253 = vadd.f32 %v1105, %v1176
      %v1254 = vmul.f32 %v1253, 0.5
      %v1255 = vtanh.pop %v1254
      %v1256 = vmul.f32 %v1255, 0.5
      %v1257 = vadd.f32 %v1256, 0.5
      %v1258 = vadd.f32 %v1245, %v415
      %v1259 = vmul.f32 %v1252, %v1258
      %v1260 = vadd.f32 %v1106, %v1259
      %v1261 = vtanh.pop %v1260
      %v1262 = vsub.f32 %v1102, %v1261
      %v1263 = vmul.f32 %v1257, %v1262
      %v1264 = vadd.f32 %v1261, %v1263
      %vm1265 = vcmp.gt.s32.totalorder %v409, 4
      %v1266 = vsel %vm1265, 1, 0
      %1267 = vset.pattern.permute.xlu0 0
      %1268 = vperm.xlu0 %1267, %v1266
      %v1269 = vpop.permute.xlu0 %1268
      %vm1270 = vcmp.eq.s32.totalorder %v1269, 1
      %v1271 = vsel %vm1270, %v1264, 0.0
      %s1272 = scalar_lea.vmem %s7, 32
      %1273 = vst [vmem:[%s1272] sm:$0xff] %v1271
      %v1274 = vsel %vm1270, %v1264, %v1102
      %s1275 = scalar_lea.vmem [#allocation2], 120
      %v1276 = vld [vmem:[%s1275] sm:$0xff]
      %v1277 = vld [vmem:[%s1275 + $0x8] sm:$0xff]
      %v1278 = vld [vmem:[%s1275 + $0x10] sm:$0xff]
      %1279 = vmatprep.subr.mxu0 %v404
      %1280 = vmatpush1.msra.mxu0 %v403
      %1281 = vmatprep.subr.mxu0 %v401
      %1282 = vmatpush1.msra.mxu0 %v400
      %1283 = vmatprep.subr.mxu0 %v398
      %1284 = vmatpush1.msra.mxu0 %v397
      %1285 = vmatprep.subr.mxu0 %v395
      %1286 = vmatpush1.msra.mxu0 %v394
      %1287 = vmatprep.subr.mxu0 %v392
      %1288 = vmatpush1.msra.mxu0 %v391
      %1289 = vmatprep.subr.mxu0 %v389
      %1290 = vmatpush1.msra.mxu0 %v388
      %1291 = vmatprep.subr.mxu0 %v386
      %1292 = vmatpush1.msra.mxu0 %v385
      %1293 = vmatprep.subr.mxu0 %v383
      %1294 = vmatpush1.msra.mxu0 %v382
      %1295 = vmatprep.subr.mxu0 %v380
      %1296 = vmatpush1.msra.mxu0 %v379
      %1297 = vmatprep.subr.mxu0 %v377
      %1298 = vmatpush1.msra.mxu0 %v376
      %1299 = vmatprep.subr.mxu0 %v374
      %1300 = vmatpush1.msra.mxu0 %v373
      %1301 = vmatprep.subr.mxu0 %v371
      %1302 = vmatpush1.msra.mxu0 %v370
      %1303 = vmatprep.subr.mxu0 %v368
      %1304 = vmatpush1.msra.mxu0 %v367
      %1305 = vmatprep.subr.mxu0 %v365
      %1306 = vmatpush1.msra.mxu0 %v364
      %1307 = vmatprep.subr.mxu0 %v362
      %1308 = vmatpush1.msra.mxu0 %v361
      %1309 = vmatprep.subr.mxu0 %v359
      %1310 = vmatpush1.msra.mxu0 %v358
      %1311 = vmatprep.subr.mxu0 0.0
      %1312 = vmatpush2.msra.mxu0 0.0
      %1313 = vmatprep.subr.mxu0 0.0
      %1314 = vmatpush2.msra.mxu0 0.0
      %1315 = vmatprep.subr.mxu0 0.0
      %1316 = vmatpush2.msra.mxu0 0.0
      %1317 = vmatprep.subr.mxu0 0.0
      %1318 = vmatpush2.msra.mxu0 0.0
      %1319 = vmatprep.subr.mxu0 0.0
      %1320 = vmatpush2.msra.mxu0 0.0
      %1321 = vmatprep.subr.mxu0 0.0
      %1322 = vmatpush2.msra.mxu0 0.0
      %1323 = vmatprep.subr.mxu0 0.0
      %1324 = vmatpush2.msra.mxu0 0.0
      %1325 = vmatprep.subr.mxu0 0.0
      %1326 = vmatpush2.msra.mxu0 0.0
      %1327 = vmatprep.subr.mxu0 0.0
      %1328 = vmatpush2.msra.mxu0 0.0
      %1329 = vmatprep.subr.mxu0 0.0
      %1330 = vmatpush2.msra.mxu0 0.0
      %1331 = vmatprep.subr.mxu0 0.0
      %1332 = vmatpush2.msra.mxu0 0.0
      %1333 = vmatprep.subr.mxu0 0.0
      %1334 = vmatpush2.msra.mxu0 0.0
      %1335 = vmatprep.subr.mxu0 0.0
      %1336 = vmatpush2.msra.mxu0 0.0
      %1337 = vmatprep.subr.mxu0 0.0
      %1338 = vmatpush2.msra.mxu0 0.0
      %1339 = vmatprep.subr.mxu0 0.0
      %1340 = vmatpush2.msra.mxu0 0.0
      %1341 = vmatprep.subr.mxu0 0.0
      %1342 = vmatpush2.msra.mxu0 0.0
      %1343 = vmatprep.mubr.f32.mxu0 0.0
      %1344 = vmatmul.mubr.f32.gmra.mxu0 %v1274
      %v1345 = vpop.f32.mrf.mxu0
      %v1346 = vadd.f32 0.0, %v1345
      %v1347 = vpop.f32.mrf.mxu0
      %v1348 = vadd.f32 0.0, %v1347
      %1349 = vdwg.mxu0
      %1350 = vmatprep.subr.mxu0 0.0
      %1351 = vmatpush1.msra.mxu0 %v405
      %1352 = vmatprep.subr.mxu0 0.0
      %1353 = vmatpush1.msra.mxu0 %v402
      %1354 = vmatprep.subr.mxu0 0.0
      %1355 = vmatpush1.msra.mxu0 %v399
      %1356 = vmatprep.subr.mxu0 0.0
      %1357 = vmatpush1.msra.mxu0 %v396
      %1358 = vmatprep.subr.mxu0 0.0
      %1359 = vmatpush1.msra.mxu0 %v393
      %1360 = vmatprep.subr.mxu0 0.0
      %1361 = vmatpush1.msra.mxu0 %v390
      %1362 = vmatprep.subr.mxu0 0.0
      %1363 = vmatpush1.msra.mxu0 %v387
      %1364 = vmatprep.subr.mxu0 0.0
      %1365 = vmatpush1.msra.mxu0 %v384
      %1366 = vmatprep.subr.mxu0 0.0
      %1367 = vmatpush1.msra.mxu0 %v381
      %1368 = vmatprep.subr.mxu0 0.0
      %1369 = vmatpush1.msra.mxu0 %v378
      %1370 = vmatprep.subr.mxu0 0.0
      %1371 = vmatpush1.msra.mxu0 %v375
      %1372 = vmatprep.subr.mxu0 0.0
      %1373 = vmatpush1.msra.mxu0 %v372
      %1374 = vmatprep.subr.mxu0 0.0
      %1375 = vmatpush1.msra.mxu0 %v369
      %1376 = vmatprep.subr.mxu0 0.0
      %1377 = vmatpush1.msra.mxu0 %v366
      %1378 = vmatprep.subr.mxu0 0.0
      %1379 = vmatpush1.msra.mxu0 %v363
      %1380 = vmatprep.subr.mxu0 0.0
      %1381 = vmatpush1.msra.mxu0 %v360
      %1382 = vmatprep.subr.mxu0 0.0
      %1383 = vmatpush2.msra.mxu0 0.0
      %1384 = vmatprep.subr.mxu0 0.0
      %1385 = vmatpush2.msra.mxu0 0.0
      %1386 = vmatprep.subr.mxu0 0.0
      %1387 = vmatpush2.msra.mxu0 0.0
      %1388 = vmatprep.subr.mxu0 0.0
      %1389 = vmatpush2.msra.mxu0 0.0
      %1390 = vmatprep.subr.mxu0 0.0
      %1391 = vmatpush2.msra.mxu0 0.0
      %1392 = vmatprep.subr.mxu0 0.0
      %1393 = vmatpush2.msra.mxu0 0.0
      %1394 = vmatprep.subr.mxu0 0.0
      %1395 = vmatpush2.msra.mxu0 0.0
      %1396 = vmatprep.subr.mxu0 0.0
      %1397 = vmatpush2.msra.mxu0 0.0
      %1398 = vmatprep.subr.mxu0 0.0
      %1399 = vmatpush2.msra.mxu0 0.0
      %1400 = vmatprep.subr.mxu0 0.0
      %1401 = vmatpush2.msra.mxu0 0.0
      %1402 = vmatprep.subr.mxu0 0.0
      %1403 = vmatpush2.msra.mxu0 0.0
      %1404 = vmatprep.subr.mxu0 0.0
      %1405 = vmatpush2.msra.mxu0 0.0
      %1406 = vmatprep.subr.mxu0 0.0
      %1407 = vmatpush2.msra.mxu0 0.0
      %1408 = vmatprep.subr.mxu0 0.0
      %1409 = vmatpush2.msra.mxu0 0.0
      %1410 = vmatprep.subr.mxu0 0.0
      %1411 = vmatpush2.msra.mxu0 0.0
      %1412 = vmatprep.subr.mxu0 0.0
      %1413 = vmatpush2.msra.mxu0 0.0
      %1414 = vmatprep.mubr.f32.mxu0 0.0
      %1415 = vmatmul.mubr.f32.gmra.mxu0 %v1274
      %v1416 = vpop.f32.mrf.mxu0
      %v1417 = vadd.f32 0.0, %v1416
      %v1418 = vpop.f32.mrf.mxu0
      %1419 = vdwg.mxu0
      %v1420 = vadd.f32 %v1276, %v1346
      %v1421 = vmul.f32 %v1420, 0.5
      %v1422 = vtanh.pop %v1421
      %v1423 = vmul.f32 %v1422, 0.5
      %v1424 = vadd.f32 %v1423, 0.5
      %v1425 = vadd.f32 %v1277, %v1348
      %v1426 = vmul.f32 %v1425, 0.5
      %v1427 = vtanh.pop %v1426
      %v1428 = vmul.f32 %v1427, 0.5
      %v1429 = vadd.f32 %v1428, 0.5
      %v1430 = vadd.f32 %v1417, %v415
      %v1431 = vmul.f32 %v1424, %v1430
      %v1432 = vadd.f32 %v1278, %v1431
      %v1433 = vtanh.pop %v1432
      %v1434 = vsub.f32 %v1274, %v1433
      %v1435 = vmul.f32 %v1429, %v1434
      %v1436 = vadd.f32 %v1433, %v1435
      %vm1437 = vcmp.gt.s32.totalorder %v409, 5
      %v1438 = vsel %vm1437, 1, 0
      %1439 = vset.pattern.permute.xlu0 0
      %1440 = vperm.xlu0 %1439, %v1438
      %v1441 = vpop.permute.xlu0 %1440
      %vm1442 = vcmp.eq.s32.totalorder %v1441, 1
      %v1443 = vsel %vm1442, %v1436, 0.0
      %s1444 = scalar_lea.vmem %s7, 40
      %1445 = vst [vmem:[%s1444] sm:$0xff] %v1443
      %v1446 = vsel %vm1442, %v1436, %v1274
      %s1447 = scalar_lea.vmem [#allocation2], 144
      %v1448 = vld [vmem:[%s1447] sm:$0xff]
      %v1449 = vld [vmem:[%s1447 + $0x8] sm:$0xff]
      %v1450 = vld [vmem:[%s1447 + $0x10] sm:$0xff]
      %1451 = vmatprep.subr.mxu0 %v404
      %1452 = vmatpush1.msra.mxu0 %v403
      %1453 = vmatprep.subr.mxu0 %v401
      %1454 = vmatpush1.msra.mxu0 %v400
      %1455 = vmatprep.subr.mxu0 %v398
      %1456 = vmatpush1.msra.mxu0 %v397
      %1457 = vmatprep.subr.mxu0 %v395
      %1458 = vmatpush1.msra.mxu0 %v394
      %1459 = vmatprep.subr.mxu0 %v392
      %1460 = vmatpush1.msra.mxu0 %v391
      %1461 = vmatprep.subr.mxu0 %v389
      %1462 = vmatpush1.msra.mxu0 %v388
      %1463 = vmatprep.subr.mxu0 %v386
      %1464 = vmatpush1.msra.mxu0 %v385
      %1465 = vmatprep.subr.mxu0 %v383
      %1466 = vmatpush1.msra.mxu0 %v382
      %1467 = vmatprep.subr.mxu0 %v380
      %1468 = vmatpush1.msra.mxu0 %v379
      %1469 = vmatprep.subr.mxu0 %v377
      %1470 = vmatpush1.msra.mxu0 %v376
      %1471 = vmatprep.subr.mxu0 %v374
      %1472 = vmatpush1.msra.mxu0 %v373
      %1473 = vmatprep.subr.mxu0 %v371
      %1474 = vmatpush1.msra.mxu0 %v370
      %1475 = vmatprep.subr.mxu0 %v368
      %1476 = vmatpush1.msra.mxu0 %v367
      %1477 = vmatprep.subr.mxu0 %v365
      %1478 = vmatpush1.msra.mxu0 %v364
      %1479 = vmatprep.subr.mxu0 %v362
      %1480 = vmatpush1.msra.mxu0 %v361
      %1481 = vmatprep.subr.mxu0 %v359
      %1482 = vmatpush1.msra.mxu0 %v358
      %1483 = vmatprep.subr.mxu0 0.0
      %1484 = vmatpush2.msra.mxu0 0.0
      %1485 = vmatprep.subr.mxu0 0.0
      %1486 = vmatpush2.msra.mxu0 0.0
      %1487 = vmatprep.subr.mxu0 0.0
      %1488 = vmatpush2.msra.mxu0 0.0
      %1489 = vmatprep.subr.mxu0 0.0
      %1490 = vmatpush2.msra.mxu0 0.0
      %1491 = vmatprep.subr.mxu0 0.0
      %1492 = vmatpush2.msra.mxu0 0.0
      %1493 = vmatprep.subr.mxu0 0.0
      %1494 = vmatpush2.msra.mxu0 0.0
      %1495 = vmatprep.subr.mxu0 0.0
      %1496 = vmatpush2.msra.mxu0 0.0
      %1497 = vmatprep.subr.mxu0 0.0
      %1498 = vmatpush2.msra.mxu0 0.0
      %1499 = vmatprep.subr.mxu0 0.0
      %1500 = vmatpush2.msra.mxu0 0.0
      %1501 = vmatprep.subr.mxu0 0.0
      %1502 = vmatpush2.msra.mxu0 0.0
      %1503 = vmatprep.subr.mxu0 0.0
      %1504 = vmatpush2.msra.mxu0 0.0
      %1505 = vmatprep.subr.mxu0 0.0
      %1506 = vmatpush2.msra.mxu0 0.0
      %1507 = vmatprep.subr.mxu0 0.0
      %1508 = vmatpush2.msra.mxu0 0.0
      %1509 = vmatprep.subr.mxu0 0.0
      %1510 = vmatpush2.msra.mxu0 0.0
      %1511 = vmatprep.subr.mxu0 0.0
      %1512 = vmatpush2.msra.mxu0 0.0
      %1513 = vmatprep.subr.mxu0 0.0
      %1514 = vmatpush2.msra.mxu0 0.0
      %1515 = vmatprep.mubr.f32.mxu0 0.0
      %1516 = vmatmul.mubr.f32.gmra.mxu0 %v1446
      %v1517 = vpop.f32.mrf.mxu0
      %v1518 = vadd.f32 0.0, %v1517
      %v1519 = vpop.f32.mrf.mxu0
      %v1520 = vadd.f32 0.0, %v1519
      %1521 = vdwg.mxu0
      %1522 = vmatprep.subr.mxu0 0.0
      %1523 = vmatpush1.msra.mxu0 %v405
      %1524 = vmatprep.subr.mxu0 0.0
      %1525 = vmatpush1.msra.mxu0 %v402
      %1526 = vmatprep.subr.mxu0 0.0
      %1527 = vmatpush1.msra.mxu0 %v399
      %1528 = vmatprep.subr.mxu0 0.0
      %1529 = vmatpush1.msra.mxu0 %v396
      %1530 = vmatprep.subr.mxu0 0.0
      %1531 = vmatpush1.msra.mxu0 %v393
      %1532 = vmatprep.subr.mxu0 0.0
      %1533 = vmatpush1.msra.mxu0 %v390
      %1534 = vmatprep.subr.mxu0 0.0
      %1535 = vmatpush1.msra.mxu0 %v387
      %1536 = vmatprep.subr.mxu0 0.0
      %1537 = vmatpush1.msra.mxu0 %v384
      %1538 = vmatprep.subr.mxu0 0.0
      %1539 = vmatpush1.msra.mxu0 %v381
      %1540 = vmatprep.subr.mxu0 0.0
      %1541 = vmatpush1.msra.mxu0 %v378
      %1542 = vmatprep.subr.mxu0 0.0
      %1543 = vmatpush1.msra.mxu0 %v375
      %1544 = vmatprep.subr.mxu0 0.0
      %1545 = vmatpush1.msra.mxu0 %v372
      %1546 = vmatprep.subr.mxu0 0.0
      %1547 = vmatpush1.msra.mxu0 %v369
      %1548 = vmatprep.subr.mxu0 0.0
      %1549 = vmatpush1.msra.mxu0 %v366
      %1550 = vmatprep.subr.mxu0 0.0
      %1551 = vmatpush1.msra.mxu0 %v363
      %1552 = vmatprep.subr.mxu0 0.0
      %1553 = vmatpush1.msra.mxu0 %v360
      %1554 = vmatprep.subr.mxu0 0.0
      %1555 = vmatpush2.msra.mxu0 0.0
      %1556 = vmatprep.subr.mxu0 0.0
      %1557 = vmatpush2.msra.mxu0 0.0
      %1558 = vmatprep.subr.mxu0 0.0
      %1559 = vmatpush2.msra.mxu0 0.0
      %1560 = vmatprep.subr.mxu0 0.0
      %1561 = vmatpush2.msra.mxu0 0.0
      %1562 = vmatprep.subr.mxu0 0.0
      %1563 = vmatpush2.msra.mxu0 0.0
      %1564 = vmatprep.subr.mxu0 0.0
      %1565 = vmatpush2.msra.mxu0 0.0
      %1566 = vmatprep.subr.mxu0 0.0
      %1567 = vmatpush2.msra.mxu0 0.0
      %1568 = vmatprep.subr.mxu0 0.0
      %1569 = vmatpush2.msra.mxu0 0.0
      %1570 = vmatprep.subr.mxu0 0.0
      %1571 = vmatpush2.msra.mxu0 0.0
      %1572 = vmatprep.subr.mxu0 0.0
      %1573 = vmatpush2.msra.mxu0 0.0
      %1574 = vmatprep.subr.mxu0 0.0
      %1575 = vmatpush2.msra.mxu0 0.0
      %1576 = vmatprep.subr.mxu0 0.0
      %1577 = vmatpush2.msra.mxu0 0.0
      %1578 = vmatprep.subr.mxu0 0.0
      %1579 = vmatpush2.msra.mxu0 0.0
      %1580 = vmatprep.subr.mxu0 0.0
      %1581 = vmatpush2.msra.mxu0 0.0
      %1582 = vmatprep.subr.mxu0 0.0
      %1583 = vmatpush2.msra.mxu0 0.0
      %1584 = vmatprep.subr.mxu0 0.0
      %1585 = vmatpush2.msra.mxu0 0.0
      %1586 = vmatprep.mubr.f32.mxu0 0.0
      %1587 = vmatmul.mubr.f32.gmra.mxu0 %v1446
      %v1588 = vpop.f32.mrf.mxu0
      %v1589 = vadd.f32 0.0, %v1588
      %v1590 = vpop.f32.mrf.mxu0
      %1591 = vdwg.mxu0
      %v1592 = vadd.f32 %v1448, %v1518
      %v1593 = vmul.f32 %v1592, 0.5
      %v1594 = vtanh.pop %v1593
      %v1595 = vmul.f32 %v1594, 0.5
      %v1596 = vadd.f32 %v1595, 0.5
      %v1597 = vadd.f32 %v1449, %v1520
      %v1598 = vmul.f32 %v1597, 0.5
      %v1599 = vtanh.pop %v1598
      %v1600 = vmul.f32 %v1599, 0.5
      %v1601 = vadd.f32 %v1600, 0.5
      %v1602 = vadd.f32 %v1589, %v415
      %v1603 = vmul.f32 %v1596, %v1602
      %v1604 = vadd.f32 %v1450, %v1603
      %v1605 = vtanh.pop %v1604
      %v1606 = vsub.f32 %v1446, %v1605
      %v1607 = vmul.f32 %v1601, %v1606
      %v1608 = vadd.f32 %v1605, %v1607
      %vm1609 = vcmp.gt.s32.totalorder %v409, 6
      %v1610 = vsel %vm1609, 1, 0
      %1611 = vset.pattern.permute.xlu0 0
      %1612 = vperm.xlu0 %1611, %v1610
      %v1613 = vpop.permute.xlu0 %1612
      %vm1614 = vcmp.eq.s32.totalorder %v1613, 1
      %v1615 = vsel %vm1614, %v1608, 0.0
      %s1616 = scalar_lea.vmem %s7, 48
      %1617 = vst [vmem:[%s1616] sm:$0xff] %v1615
      %v1618 = vsel %vm1614, %v1608, %v1446
      %s1619 = scalar_lea.vmem [#allocation2], 168
      %v1620 = vld [vmem:[%s1619] sm:$0xff]
      %v1621 = vld [vmem:[%s1619 + $0x8] sm:$0xff]
      %v1622 = vld [vmem:[%s1619 + $0x10] sm:$0xff]
      %1623 = vmatprep.subr.mxu0 %v404
      %1624 = vmatpush1.msra.mxu0 %v403
      %1625 = vmatprep.subr.mxu0 %v401
      %1626 = vmatpush1.msra.mxu0 %v400
      %1627 = vmatprep.subr.mxu0 %v398
      %1628 = vmatpush1.msra.mxu0 %v397
      %1629 = vmatprep.subr.mxu0 %v395
      %1630 = vmatpush1.msra.mxu0 %v394
      %1631 = vmatprep.subr.mxu0 %v392
      %1632 = vmatpush1.msra.mxu0 %v391
      %1633 = vmatprep.subr.mxu0 %v389
      %1634 = vmatpush1.msra.mxu0 %v388
      %1635 = vmatprep.subr.mxu0 %v386
      %1636 = vmatpush1.msra.mxu0 %v385
      %1637 = vmatprep.subr.mxu0 %v383
      %1638 = vmatpush1.msra.mxu0 %v382
      %1639 = vmatprep.subr.mxu0 %v380
      %1640 = vmatpush1.msra.mxu0 %v379
      %1641 = vmatprep.subr.mxu0 %v377
      %1642 = vmatpush1.msra.mxu0 %v376
      %1643 = vmatprep.subr.mxu0 %v374
      %1644 = vmatpush1.msra.mxu0 %v373
      %1645 = vmatprep.subr.mxu0 %v371
      %1646 = vmatpush1.msra.mxu0 %v370
      %1647 = vmatprep.subr.mxu0 %v368
      %1648 = vmatpush1.msra.mxu0 %v367
      %1649 = vmatprep.subr.mxu0 %v365
      %1650 = vmatpush1.msra.mxu0 %v364
      %1651 = vmatprep.subr.mxu0 %v362
      %1652 = vmatpush1.msra.mxu0 %v361
      %1653 = vmatprep.subr.mxu0 %v359
      %1654 = vmatpush1.msra.mxu0 %v358
      %1655 = vmatprep.subr.mxu0 0.0
      %1656 = vmatpush2.msra.mxu0 0.0
      %1657 = vmatprep.subr.mxu0 0.0
      %1658 = vmatpush2.msra.mxu0 0.0
      %1659 = vmatprep.subr.mxu0 0.0
      %1660 = vmatpush2.msra.mxu0 0.0
      %1661 = vmatprep.subr.mxu0 0.0
      %1662 = vmatpush2.msra.mxu0 0.0
      %1663 = vmatprep.subr.mxu0 0.0
      %1664 = vmatpush2.msra.mxu0 0.0
      %1665 = vmatprep.subr.mxu0 0.0
      %1666 = vmatpush2.msra.mxu0 0.0
      %1667 = vmatprep.subr.mxu0 0.0
      %1668 = vmatpush2.msra.mxu0 0.0
      %1669 = vmatprep.subr.mxu0 0.0
      %1670 = vmatpush2.msra.mxu0 0.0
      %1671 = vmatprep.subr.mxu0 0.0
      %1672 = vmatpush2.msra.mxu0 0.0
      %1673 = vmatprep.subr.mxu0 0.0
      %1674 = vmatpush2.msra.mxu0 0.0
      %1675 = vmatprep.subr.mxu0 0.0
      %1676 = vmatpush2.msra.mxu0 0.0
      %1677 = vmatprep.subr.mxu0 0.0
      %1678 = vmatpush2.msra.mxu0 0.0
      %1679 = vmatprep.subr.mxu0 0.0
      %1680 = vmatpush2.msra.mxu0 0.0
      %1681 = vmatprep.subr.mxu0 0.0
      %1682 = vmatpush2.msra.mxu0 0.0
      %1683 = vmatprep.subr.mxu0 0.0
      %1684 = vmatpush2.msra.mxu0 0.0
      %1685 = vmatprep.subr.mxu0 0.0
      %1686 = vmatpush2.msra.mxu0 0.0
      %1687 = vmatprep.mubr.f32.mxu0 0.0
      %1688 = vmatmul.mubr.f32.gmra.mxu0 %v1618
      %v1689 = vpop.f32.mrf.mxu0
      %v1690 = vadd.f32 0.0, %v1689
      %v1691 = vpop.f32.mrf.mxu0
      %v1692 = vadd.f32 0.0, %v1691
      %1693 = vdwg.mxu0
      %1694 = vmatprep.subr.mxu0 0.0
      %1695 = vmatpush1.msra.mxu0 %v405
      %1696 = vmatprep.subr.mxu0 0.0
      %1697 = vmatpush1.msra.mxu0 %v402
      %1698 = vmatprep.subr.mxu0 0.0
      %1699 = vmatpush1.msra.mxu0 %v399
      %1700 = vmatprep.subr.mxu0 0.0
      %1701 = vmatpush1.msra.mxu0 %v396
      %1702 = vmatprep.subr.mxu0 0.0
      %1703 = vmatpush1.msra.mxu0 %v393
      %1704 = vmatprep.subr.mxu0 0.0
      %1705 = vmatpush1.msra.mxu0 %v390
      %1706 = vmatprep.subr.mxu0 0.0
      %1707 = vmatpush1.msra.mxu0 %v387
      %1708 = vmatprep.subr.mxu0 0.0
      %1709 = vmatpush1.msra.mxu0 %v384
      %1710 = vmatprep.subr.mxu0 0.0
      %1711 = vmatpush1.msra.mxu0 %v381
      %1712 = vmatprep.subr.mxu0 0.0
      %1713 = vmatpush1.msra.mxu0 %v378
      %1714 = vmatprep.subr.mxu0 0.0
      %1715 = vmatpush1.msra.mxu0 %v375
      %1716 = vmatprep.subr.mxu0 0.0
      %1717 = vmatpush1.msra.mxu0 %v372
      %1718 = vmatprep.subr.mxu0 0.0
      %1719 = vmatpush1.msra.mxu0 %v369
      %1720 = vmatprep.subr.mxu0 0.0
      %1721 = vmatpush1.msra.mxu0 %v366
      %1722 = vmatprep.subr.mxu0 0.0
      %1723 = vmatpush1.msra.mxu0 %v363
      %1724 = vmatprep.subr.mxu0 0.0
      %1725 = vmatpush1.msra.mxu0 %v360
      %1726 = vmatprep.subr.mxu0 0.0
      %1727 = vmatpush2.msra.mxu0 0.0
      %1728 = vmatprep.subr.mxu0 0.0
      %1729 = vmatpush2.msra.mxu0 0.0
      %1730 = vmatprep.subr.mxu0 0.0
      %1731 = vmatpush2.msra.mxu0 0.0
      %1732 = vmatprep.subr.mxu0 0.0
      %1733 = vmatpush2.msra.mxu0 0.0
      %1734 = vmatprep.subr.mxu0 0.0
      %1735 = vmatpush2.msra.mxu0 0.0
      %1736 = vmatprep.subr.mxu0 0.0
      %1737 = vmatpush2.msra.mxu0 0.0
      %1738 = vmatprep.subr.mxu0 0.0
      %1739 = vmatpush2.msra.mxu0 0.0
      %1740 = vmatprep.subr.mxu0 0.0
      %1741 = vmatpush2.msra.mxu0 0.0
      %1742 = vmatprep.subr.mxu0 0.0
      %1743 = vmatpush2.msra.mxu0 0.0
      %1744 = vmatprep.subr.mxu0 0.0
      %1745 = vmatpush2.msra.mxu0 0.0
      %1746 = vmatprep.subr.mxu0 0.0
      %1747 = vmatpush2.msra.mxu0 0.0
      %1748 = vmatprep.subr.mxu0 0.0
      %1749 = vmatpush2.msra.mxu0 0.0
      %1750 = vmatprep.subr.mxu0 0.0
      %1751 = vmatpush2.msra.mxu0 0.0
      %1752 = vmatprep.subr.mxu0 0.0
      %1753 = vmatpush2.msra.mxu0 0.0
      %1754 = vmatprep.subr.mxu0 0.0
      %1755 = vmatpush2.msra.mxu0 0.0
      %1756 = vmatprep.subr.mxu0 0.0
      %1757 = vmatpush2.msra.mxu0 0.0
      %1758 = vmatprep.mubr.f32.mxu0 0.0
      %1759 = vmatmul.mubr.f32.gmra.mxu0 %v1618
      %v1760 = vpop.f32.mrf.mxu0
      %v1761 = vadd.f32 0.0, %v1760
      %v1762 = vpop.f32.mrf.mxu0
      %1763 = vdwg.mxu0
      %v1764 = vadd.f32 %v1620, %v1690
      %v1765 = vmul.f32 %v1764, 0.5
      %v1766 = vtanh.pop %v1765
      %v1767 = vmul.f32 %v1766, 0.5
      %v1768 = vadd.f32 %v1767, 0.5
      %v1769 = vadd.f32 %v1621, %v1692
      %v1770 = vmul.f32 %v1769, 0.5
      %v1771 = vtanh.pop %v1770
      %v1772 = vmul.f32 %v1771, 0.5
      %v1773 = vadd.f32 %v1772, 0.5
      %v1774 = vadd.f32 %v1761, %v415
      %v1775 = vmul.f32 %v1768, %v1774
      %v1776 = vadd.f32 %v1622, %v1775
      %v1777 = vtanh.pop %v1776
      %v1778 = vsub.f32 %v1618, %v1777
      %v1779 = vmul.f32 %v1773, %v1778
      %v1780 = vadd.f32 %v1777, %v1779
      %vm1781 = vcmp.gt.s32.totalorder %v409, 7
      %v1782 = vsel %vm1781, 1, 0
      %1783 = vset.pattern.permute.xlu0 0
      %1784 = vperm.xlu0 %1783, %v1782
      %v1785 = vpop.permute.xlu0 %1784
      %vm1786 = vcmp.eq.s32.totalorder %v1785, 1
      %v1787 = vsel %vm1786, %v1780, 0.0
      %s1788 = scalar_lea.vmem %s7, 56
      %1789 = vst [vmem:[%s1788] sm:$0xff] %v1787
      %v1790 = vsel %vm1786, %v1780, %v1618
      %1791 = vst [vmem:[#allocation3] sm:$0xff] %v1790
    $region41: #{_encoder_pallas.1} parent=1 // pred_fallthru
      _
    %p1792 = scmp.ge.s32.totalorder %s43, %s49
    // Predicated region
    $region42: #{_encoder_pallas.1} parent=1 // pred_check
      %p1793 = pneg %p1792
    $region43: #{_encoder_pallas.1} parent=1 // pred_check_branch
      %1795 = sbr.rel (%p1793) target = $region45
    $region44: #{_encoder_pallas.1} parent=1 // pred_region
      %1796 = vst [vmem:[%s7] sm:$0xff] 0.0
      %1797 = vst [vmem:[%s7 + $0x8] sm:$0xff] 0.0
      %1798 = vst [vmem:[%s7 + $0x10] sm:$0xff] 0.0
      %1799 = vst [vmem:[%s7 + $0x18] sm:$0xff] 0.0
      %1800 = vst [vmem:[%s7 + $0x20] sm:$0xff] 0.0
      %1801 = vst [vmem:[%s7 + $0x28] sm:$0xff] 0.0
      %1802 = vst [vmem:[%s7 + $0x30] sm:$0xff] 0.0
      %1803 = vst [vmem:[%s7 + $0x38] sm:$0xff] 0.0
    $region45: #{_encoder_pallas.1} parent=1 // pred_fallthru
      _
    // Predicated region
    $region46: #{_encoder_pallas.1} parent=1 // pred_check
      %p1804 = pneg %p44
    $region47: #{_encoder_pallas.1} parent=1 // pred_check_branch
      %1806 = sbr.rel (%p1804) target = $region49
    $region48: #{_encoder_pallas.1} parent=1 // pred_region
      %v1807 = vld [vmem:[#allocation3] sm:$0xff]
      %1808 = vst [vmem:[%s8] sm:$0xff] %v1807
    $region49: #{_encoder_pallas.1} parent=1 // pred_fallthru
      _
    // Predicated region
    $region50: #{_encoder_pallas.1} parent=1 // pred_check
      _
    $region51: #{_encoder_pallas.1} parent=1 // pred_check_branch
      %1810 = sbr.rel (0) target = $region53
    $region52: #{_encoder_pallas.1} parent=1 // pred_region
      _
    $region53: #{_encoder_pallas.1} parent=1 // pred_fallthru
      _
    // Predicated region
    $region54: #{_encoder_pallas.1} parent=1 // pred_check
      _
    $region55: #{_encoder_pallas.1} parent=1 // pred_check_branch
      %1812 = sbr.rel (0) target = $region57
    $region56: #{_encoder_pallas.1} parent=1 // pred_region
      _
    $region57: #{_encoder_pallas.1} parent=1 // pred_fallthru
      _
    // Predicated region
    $region58: #{_encoder_pallas.1} parent=1 // pred_check
      _
    $region59: #{_encoder_pallas.1} parent=1 // pred_check_branch
      %1814 = sbr.rel (0) target = $region61
    $region60: #{_encoder_pallas.1} parent=1 // pred_region
      _
    $region61: #{_encoder_pallas.1} parent=1 // pred_fallthru
      _
    // Predicated region
    $region62: #{_encoder_pallas.1} parent=1 // pred_check
      _
    $region63: #{_encoder_pallas.1} parent=1 // pred_check_branch
      %1816 = sbr.rel (0) target = $region65
    $region64: #{_encoder_pallas.1} parent=1 // pred_region
      _
    $region65: #{_encoder_pallas.1} parent=1 // pred_fallthru
      _
    %1817 = vsyncpa [#allocation6], 1

</llo_original>
